<compile_context>
chip_gen: v7x
topology: tpu7x:2x2x1
jax: 0.10.0
libtpu: 0.0.40
codegen_flags: <defaults>
</compile_context>

<pallas_src>
import math

import jax
import jax.numpy as jnp
from jax.experimental import pallas as pl
from jax.experimental.pallas import tpu as pltpu

EPS = 1e-5
NEG_SLOPE = 0.2
HIDDEN = (128, 256, 512, 1024)   # fixed by the PyTorch module
LATENT_PAD = 128                 # latent_dim=100 zero-padded to a full lane tile


def _bn_leaky(x, gamma, beta):
    # Training-mode BatchNorm1d (biased batch stats) folded into one scale/shift,
    # fused with LeakyReLU(0.2).
    mean = jnp.mean(x, axis=0, keepdims=True)
    var = jnp.mean(x * x, axis=0, keepdims=True) - mean * mean
    scale = gamma * jax.lax.rsqrt(var + EPS)
    shift = beta - mean * scale
    y = x * scale + shift
    return jnp.maximum(y, NEG_SLOPE * y)   # LeakyReLU(0.2): single VALU op


def generator_kernel(z_ref, w1_ref, vec_ref,
                     w2_hbm, w3_hbm, w4_hbm, w5_hbm,
                     out_ref,
                     w2_v, w3_v, w4_v, w5_v, sem):
    # vec_ref: (16, W) f32 slab; rows (2i, 2i+1) hold (gamma, beta) for hidden
    #          layer i, row 8 holds the output-head bias b5 (lane-padded).

    # Kick off all weight prefetch DMAs immediately so HBM->VMEM transfers of
    # the large w3/w4/w5 tiles overlap with layer-1..3 compute.
    copies = []
    for i, (hbm, vm) in enumerate(((w2_hbm, w2_v), (w3_hbm, w3_v),
                                   (w4_hbm, w4_v), (w5_hbm, w5_v))):
        cp = pltpu.make_async_copy(hbm, vm, sem.at[i])
        cp.start()
        copies.append(cp)

    # Layer 1: only needs the small auto-DMA'd w1 tile (bf16 x bf16 -> f32 MXU).
    h = jnp.dot(z_ref[...].astype(jnp.bfloat16), w1_ref[...],
                preferred_element_type=jnp.float32)
    h = _bn_leaky(h, vec_ref[0:1, :HIDDEN[0]], vec_ref[1:2, :HIDDEN[0]])

    # Layers 2..4: wait only for the weight this layer needs.
    for i, (cp, vm, d) in enumerate(zip(copies[:3], (w2_v, w3_v, w4_v), HIDDEN[1:]),
                                    start=1):
        cp.wait()
        h = jnp.dot(h.astype(jnp.bfloat16), vm[...],
                    preferred_element_type=jnp.float32)
        h = _bn_leaky(h, vec_ref[2 * i:2 * i + 1, :d],
                      vec_ref[2 * i + 1:2 * i + 2, :d])

    # Output head: Linear + Tanh.
    copies[3].wait()
    out_feats = out_ref.shape[1]
    h = jnp.dot(h.astype(jnp.bfloat16), w5_v[...],
                preferred_element_type=jnp.float32)
    h = h + vec_ref[8:9, :out_feats]
    out_ref[...] = jnp.tanh(h)


def init_generator_params(key, latent_dim=100, image_size=32, output_channel=1):
    out_feats = output_channel * image_size * image_size
    dims = [latent_dim, *HIDDEN, out_feats]
    params = {}
    keys = jax.random.split(key, 2 * (len(dims) - 1) + 2 * len(HIDDEN))

    for i in range(len(dims) - 1):
        fan_in = dims[i]
        bound = 1.0 / math.sqrt(fan_in)
        w = jax.random.uniform(keys[2 * i], (dims[i], dims[i + 1]),
                               jnp.float32, -bound, bound)
        if i == 0:
            # Zero-pad the contraction dim 100 -> 128 (padded rows contribute nothing).
            w = jnp.pad(w, ((0, LATENT_PAD - latent_dim), (0, 0)))
        params[f"w{i + 1}"] = w.astype(jnp.bfloat16)   # bf16 storage + native MXU path
        params[f"b{i + 1}"] = jax.random.uniform(keys[2 * i + 1], (1, dims[i + 1]),
                                                 jnp.float32, -bound, bound)

    # BatchNorm affine params. (PyTorch init is weight=1/bias=0; small random values
    # are used here so the packed-slab indexing is actually exercised by the check.)
    ko = 2 * (len(dims) - 1)
    for i, d in enumerate(HIDDEN, start=1):
        params[f"g{i}"] = 1.0 + 0.1 * jax.random.normal(
            keys[ko + 2 * (i - 1)], (1, d), jnp.float32)
        params[f"be{i}"] = 0.1 * jax.random.normal(
            keys[ko + 2 * (i - 1) + 1], (1, d), jnp.float32)

    # Pack gamma/beta of the 4 hidden layers (rows 0..7) and b5 (row 8) into one
    # contiguous f32 slab -> a single small DMA for all per-feature vectors.
    W = max(1024, out_feats)
    rows = []
    for i, d in enumerate(HIDDEN, start=1):
        rows.append(jnp.pad(params[f"g{i}"], ((0, 0), (0, W - d))))
        rows.append(jnp.pad(params[f"be{i}"], ((0, 0), (0, W - d))))
    rows.append(jnp.pad(params["b5"], ((0, 0), (0, W - out_feats))))
    vec = jnp.concatenate(rows, axis=0)                            # (9, W)
    params["vec"] = jnp.pad(vec, ((0, 16 - vec.shape[0]), (0, 0)))  # (16, W)
    return params


def generator_forward(z, params, image_size=32, output_channel=1):
    B, latent_dim = z.shape
    out_feats = output_channel * image_size * image_size
    zp = jnp.pad(z, ((0, 0), (0, LATENT_PAD - latent_dim)))   # (B, 128) aligned tile

    vmem = pl.BlockSpec(memory_space=pltpu.MemorySpace.VMEM)
    hbm = pl.BlockSpec(memory_space=pl.ANY)   # manual prefetch inside the kernel

    flat = pl.pallas_call(
        generator_kernel,
        out_shape=jax.ShapeDtypeStruct((B, out_feats), jnp.float32),
        in_specs=[vmem, vmem, vmem, hbm, hbm, hbm, hbm],
        out_specs=vmem,
        scratch_shapes=[
            pltpu.VMEM(params["w2"].shape, jnp.bfloat16),
            pltpu.VMEM(params["w3"].shape, jnp.bfloat16),
            pltpu.VMEM(params["w4"].shape, jnp.bfloat16),
            pltpu.VMEM(params["w5"].shape, jnp.bfloat16),
            pltpu.SemaphoreType.DMA((4,)),
        ],
        # Peak VMEM is ~2 MB of bf16 weight scratch plus small activations;
        # 16 MiB fits v5e's scoped default and is well inside v7x's 64 MiB.
        compiler_params=pltpu.CompilerParams(vmem_limit_bytes=16 * 1024 * 1024),
    )(zp, params["w1"], params["vec"],
      params["w2"], params["w3"], params["w4"], params["w5"])
    # NCHW view, matching img.view(B, C, H, W) in the PyTorch module.
    return flat.reshape(B, output_channel, image_size, image_size)


def generator_forward_ref(z, params, image_size=32, output_channel=1, latent_dim=100):
    # Pure-JAX reference mirroring PyTorch semantics with the same bf16 weight /
    # activation quantization and f32 accumulation as the kernel:
    # Linear (WITH bias) -> BatchNorm1d(train, two-pass biased variance) -> LeakyReLU.
    # The kernel drops the hidden biases (cancel in train-mode BN) and uses
    # one-pass variance; results agree to float tolerance.
    h = jnp.pad(z, ((0, 0), (0, LATENT_PAD - latent_dim)))
    for i in range(1, 5):
        h = jnp.dot(h.astype(jnp.bfloat16), params[f"w{i}"],
                    preferred_element_type=jnp.float32) + params[f"b{i}"]
        mean = jnp.mean(h, axis=0, keepdims=True)
        var = jnp.mean((h - mean) ** 2, axis=0, keepdims=True)
        h = params[f"g{i}"] * ((h - mean) * jax.lax.rsqrt(var + EPS)) + params[f"be{i}"]
        h = jnp.where(h > 0, h, NEG_SLOPE * h)
    h = jnp.tanh(jnp.dot(h.astype(jnp.bfloat16), params["w5"],
                         preferred_element_type=jnp.float32) + params["b5"])
    return h.reshape(z.shape[0], output_channel, image_size, image_size)


if __name__ == "__main__":
    # B=16: fills bf16 sublane tiles and amortizes the fixed weight-DMA cost
    # better than B=8 (see perf notes), while keeping the example small.
    B, LATENT, IMG, C = 16, 100, 16, 1
    key = jax.random.PRNGKey(0)
    kp, kz = jax.random.split(key)
    params = init_generator_params(kp, latent_dim=LATENT, image_size=IMG, output_channel=C)
    z = jax.random.normal(kz, (B, LATENT), jnp.float32)

    img = generator_forward(z, params, image_size=IMG, output_channel=C)
    img = jax.block_until_ready(img)

    ref = generator_forward_ref(z, params, image_size=IMG, output_channel=C, latent_dim=LATENT)
    assert img.shape == (B, C, IMG, IMG)
    err = float(jnp.max(jnp.abs(img - ref)))
    assert jnp.allclose(img, ref, atol=2e-3, rtol=2e-3), f"max abs err = {err}"
    print("KERNEL_OK")
</pallas_src>

<mosaic_0001>
module attributes {stable_mosaic.version = 11 : i64} {
  func.func @generator_kernel(%arg0: memref<16x128xf32, #tpu.memory_space<vmem>>, %arg1: memref<128x128xbf16, #tpu.memory_space<vmem>>, %arg2: memref<16x1024xf32, #tpu.memory_space<vmem>>, %arg3: memref<128x256xbf16, #tpu.memory_space<any>>, %arg4: memref<256x512xbf16, #tpu.memory_space<any>>, %arg5: memref<512x1024xbf16, #tpu.memory_space<any>>, %arg6: memref<1024x256xbf16, #tpu.memory_space<any>>, %arg7: memref<16x256xf32, #tpu.memory_space<vmem>>, %arg8: memref<128x256xbf16, #tpu.memory_space<vmem>>, %arg9: memref<256x512xbf16, #tpu.memory_space<vmem>>, %arg10: memref<512x1024xbf16, #tpu.memory_space<vmem>>, %arg11: memref<1024x256xbf16, #tpu.memory_space<vmem>>, %arg12: memref<4x!tpu.dma_semaphore, #tpu.memory_space<semaphore_mem>>) attributes {dimension_semantics = [], scalar_prefetch = 0 : i64, scratch_operands = 5 : i64, tpu.core_type = #tpu.core_type<tc>} {
    %c0_i32 = arith.constant 0 : i32
    %0 = tpu.memref_slice %arg12[%c0_i32] : memref<4x!tpu.dma_semaphore, #tpu.memory_space<semaphore_mem>> -> memref<1x!tpu.dma_semaphore, #tpu.memory_space<semaphore_mem>>
    %1 = tpu.memref_squeeze %0 : memref<1x!tpu.dma_semaphore, #tpu.memory_space<semaphore_mem>> -> memref<!tpu.dma_semaphore, #tpu.memory_space<semaphore_mem>>
    tpu.enqueue_dma source(%arg3 : memref<128x256xbf16, #tpu.memory_space<any>>) target(%arg8 : memref<128x256xbf16, #tpu.memory_space<vmem>>) target_semaphore(%1 : memref<!tpu.dma_semaphore, #tpu.memory_space<semaphore_mem>>)
    %c1_i32 = arith.constant 1 : i32
    %2 = tpu.memref_slice %arg12[%c1_i32] : memref<4x!tpu.dma_semaphore, #tpu.memory_space<semaphore_mem>> -> memref<1x!tpu.dma_semaphore, #tpu.memory_space<semaphore_mem>>
    %3 = tpu.memref_squeeze %2 : memref<1x!tpu.dma_semaphore, #tpu.memory_space<semaphore_mem>> -> memref<!tpu.dma_semaphore, #tpu.memory_space<semaphore_mem>>
    tpu.enqueue_dma source(%arg4 : memref<256x512xbf16, #tpu.memory_space<any>>) target(%arg9 : memref<256x512xbf16, #tpu.memory_space<vmem>>) target_semaphore(%3 : memref<!tpu.dma_semaphore, #tpu.memory_space<semaphore_mem>>)
    %c2_i32 = arith.constant 2 : i32
    %4 = tpu.memref_slice %arg12[%c2_i32] : memref<4x!tpu.dma_semaphore, #tpu.memory_space<semaphore_mem>> -> memref<1x!tpu.dma_semaphore, #tpu.memory_space<semaphore_mem>>
    %5 = tpu.memref_squeeze %4 : memref<1x!tpu.dma_semaphore, #tpu.memory_space<semaphore_mem>> -> memref<!tpu.dma_semaphore, #tpu.memory_space<semaphore_mem>>
    tpu.enqueue_dma source(%arg5 : memref<512x1024xbf16, #tpu.memory_space<any>>) target(%arg10 : memref<512x1024xbf16, #tpu.memory_space<vmem>>) target_semaphore(%5 : memref<!tpu.dma_semaphore, #tpu.memory_space<semaphore_mem>>)
    %c3_i32 = arith.constant 3 : i32
    %6 = tpu.memref_slice %arg12[%c3_i32] : memref<4x!tpu.dma_semaphore, #tpu.memory_space<semaphore_mem>> -> memref<1x!tpu.dma_semaphore, #tpu.memory_space<semaphore_mem>>
    %7 = tpu.memref_squeeze %6 : memref<1x!tpu.dma_semaphore, #tpu.memory_space<semaphore_mem>> -> memref<!tpu.dma_semaphore, #tpu.memory_space<semaphore_mem>>
    tpu.enqueue_dma source(%arg6 : memref<1024x256xbf16, #tpu.memory_space<any>>) target(%arg11 : memref<1024x256xbf16, #tpu.memory_space<vmem>>) target_semaphore(%7 : memref<!tpu.dma_semaphore, #tpu.memory_space<semaphore_mem>>)
    %c0 = arith.constant 0 : index
    %c0_0 = arith.constant 0 : index
    %8 = vector.load %arg0[%c0, %c0_0] : memref<16x128xf32, #tpu.memory_space<vmem>>, vector<16x128xf32>
    %9 = arith.truncf %8 : vector<16x128xf32> to vector<16x128xbf16>
    %c0_1 = arith.constant 0 : index
    %c0_2 = arith.constant 0 : index
    %10 = vector.load %arg1[%c0_1, %c0_2] : memref<128x128xbf16, #tpu.memory_space<vmem>>, vector<128x128xbf16>
    %cst = arith.constant dense<0.000000e+00> : vector<16x128xf32>
    %11 = tpu.matmul %9, %10, %cst {dimension_numbers = #tpu.dot_dimension_numbers<[1], [0], [0], [1], [0, 0, 1, 1], [], []>} : vector<16x128xbf16>, vector<128x128xbf16>, vector<16x128xf32> -> vector<16x128xf32>
    %c0_3 = arith.constant 0 : index
    %c0_4 = arith.constant 0 : index
    %12 = vector.load %arg2[%c0_3, %c0_4] : memref<16x1024xf32, #tpu.memory_space<vmem>>, vector<1x128xf32>
    %c1 = arith.constant 1 : index
    %c0_5 = arith.constant 0 : index
    %13 = vector.load %arg2[%c1, %c0_5] : memref<16x1024xf32, #tpu.memory_space<vmem>>, vector<1x128xf32>
    %cst_6 = arith.constant dense<0.000000e+00> : vector<128xf32>
    %14 = vector.multi_reduction <add>, %11, %cst_6 [0] : vector<16x128xf32> to vector<128xf32>
    %15 = vector.shape_cast %14 : vector<128xf32> to vector<1x128xf32>
    %cst_7 = arith.constant 1.600000e+01 : f32
    %16 = vector.broadcast %cst_7 : f32 to vector<1x128xf32>
    %17 = arith.divf %15, %16 : vector<1x128xf32>
    %18 = arith.mulf %11, %11 : vector<16x128xf32>
    %cst_8 = arith.constant dense<0.000000e+00> : vector<128xf32>
    %19 = vector.multi_reduction <add>, %18, %cst_8 [0] : vector<16x128xf32> to vector<128xf32>
    %20 = vector.shape_cast %19 : vector<128xf32> to vector<1x128xf32>
    %cst_9 = arith.constant 1.600000e+01 : f32
    %21 = vector.broadcast %cst_9 : f32 to vector<1x128xf32>
    %22 = arith.divf %20, %21 : vector<1x128xf32>
    %23 = arith.mulf %17, %17 : vector<1x128xf32>
    %24 = arith.subf %22, %23 : vector<1x128xf32>
    %cst_10 = arith.constant 9.99999974E-6 : f32
    %25 = vector.broadcast %cst_10 : f32 to vector<1x128xf32>
    %26 = arith.addf %24, %25 : vector<1x128xf32>
    %27 = math.rsqrt %26 : vector<1x128xf32>
    %28 = arith.mulf %12, %27 : vector<1x128xf32>
    %29 = arith.mulf %17, %28 : vector<1x128xf32>
    %30 = arith.subf %13, %29 : vector<1x128xf32>
    %31 = vector.broadcast %28 : vector<1x128xf32> to vector<16x128xf32>
    %32 = arith.mulf %11, %31 : vector<16x128xf32>
    %33 = vector.broadcast %30 : vector<1x128xf32> to vector<16x128xf32>
    %34 = arith.addf %32, %33 : vector<16x128xf32>
    %cst_11 = arith.constant 2.000000e-01 : f32
    %35 = vector.broadcast %cst_11 : f32 to vector<16x128xf32>
    %36 = arith.mulf %35, %34 : vector<16x128xf32>
    %37 = arith.maximumf %34, %36 : vector<16x128xf32>
    %c0_i32_12 = arith.constant 0 : i32
    %38 = tpu.memref_slice %arg12[%c0_i32_12] : memref<4x!tpu.dma_semaphore, #tpu.memory_space<semaphore_mem>> -> memref<1x!tpu.dma_semaphore, #tpu.memory_space<semaphore_mem>>
    %39 = tpu.memref_squeeze %38 : memref<1x!tpu.dma_semaphore, #tpu.memory_space<semaphore_mem>> -> memref<!tpu.dma_semaphore, #tpu.memory_space<semaphore_mem>>
    tpu.wait_dma2 semaphore(%39 : memref<!tpu.dma_semaphore, #tpu.memory_space<semaphore_mem>>) src(%arg3 : memref<128x256xbf16, #tpu.memory_space<any>>) dst(%arg8 : memref<128x256xbf16, #tpu.memory_space<vmem>>)
    %40 = arith.truncf %37 : vector<16x128xf32> to vector<16x128xbf16>
    %c0_13 = arith.constant 0 : index
    %c0_14 = arith.constant 0 : index
    %41 = vector.load %arg8[%c0_13, %c0_14] : memref<128x256xbf16, #tpu.memory_space<vmem>>, vector<128x256xbf16>
    %cst_15 = arith.constant dense<0.000000e+00> : vector<16x256xf32>
    %42 = tpu.matmul %40, %41, %cst_15 {dimension_numbers = #tpu.dot_dimension_numbers<[1], [0], [0], [1], [0, 0, 1, 1], [], []>} : vector<16x128xbf16>, vector<128x256xbf16>, vector<16x256xf32> -> vector<16x256xf32>
    %c2 = arith.constant 2 : index
    %c0_16 = arith.constant 0 : index
    %43 = vector.load %arg2[%c2, %c0_16] : memref<16x1024xf32, #tpu.memory_space<vmem>>, vector<1x256xf32>
    %c3 = arith.constant 3 : index
    %c0_17 = arith.constant 0 : index
    %44 = vector.load %arg2[%c3, %c0_17] : memref<16x1024xf32, #tpu.memory_space<vmem>>, vector<1x256xf32>
    %cst_18 = arith.constant dense<0.000000e+00> : vector<256xf32>
    %45 = vector.multi_reduction <add>, %42, %cst_18 [0] : vector<16x256xf32> to vector<256xf32>
    %46 = vector.shape_cast %45 : vector<256xf32> to vector<1x256xf32>
    %cst_19 = arith.constant 1.600000e+01 : f32
    %47 = vector.broadcast %cst_19 : f32 to vector<1x256xf32>
    %48 = arith.divf %46, %47 : vector<1x256xf32>
    %49 = arith.mulf %42, %42 : vector<16x256xf32>
    %cst_20 = arith.constant dense<0.000000e+00> : vector<256xf32>
    %50 = vector.multi_reduction <add>, %49, %cst_20 [0] : vector<16x256xf32> to vector<256xf32>
    %51 = vector.shape_cast %50 : vector<256xf32> to vector<1x256xf32>
    %cst_21 = arith.constant 1.600000e+01 : f32
    %52 = vector.broadcast %cst_21 : f32 to vector<1x256xf32>
    %53 = arith.divf %51, %52 : vector<1x256xf32>
    %54 = arith.mulf %48, %48 : vector<1x256xf32>
    %55 = arith.subf %53, %54 : vector<1x256xf32>
    %cst_22 = arith.constant 9.99999974E-6 : f32
    %56 = vector.broadcast %cst_22 : f32 to vector<1x256xf32>
    %57 = arith.addf %55, %56 : vector<1x256xf32>
    %58 = math.rsqrt %57 : vector<1x256xf32>
    %59 = arith.mulf %43, %58 : vector<1x256xf32>
    %60 = arith.mulf %48, %59 : vector<1x256xf32>
    %61 = arith.subf %44, %60 : vector<1x256xf32>
    %62 = vector.broadcast %59 : vector<1x256xf32> to vector<16x256xf32>
    %63 = arith.mulf %42, %62 : vector<16x256xf32>
    %64 = vector.broadcast %61 : vector<1x256xf32> to vector<16x256xf32>
    %65 = arith.addf %63, %64 : vector<16x256xf32>
    %cst_23 = arith.constant 2.000000e-01 : f32
    %66 = vector.broadcast %cst_23 : f32 to vector<16x256xf32>
    %67 = arith.mulf %66, %65 : vector<16x256xf32>
    %68 = arith.maximumf %65, %67 : vector<16x256xf32>
    %c1_i32_24 = arith.constant 1 : i32
    %69 = tpu.memref_slice %arg12[%c1_i32_24] : memref<4x!tpu.dma_semaphore, #tpu.memory_space<semaphore_mem>> -> memref<1x!tpu.dma_semaphore, #tpu.memory_space<semaphore_mem>>
    %70 = tpu.memref_squeeze %69 : memref<1x!tpu.dma_semaphore, #tpu.memory_space<semaphore_mem>> -> memref<!tpu.dma_semaphore, #tpu.memory_space<semaphore_mem>>
    tpu.wait_dma2 semaphore(%70 : memref<!tpu.dma_semaphore, #tpu.memory_space<semaphore_mem>>) src(%arg4 : memref<256x512xbf16, #tpu.memory_space<any>>) dst(%arg9 : memref<256x512xbf16, #tpu.memory_space<vmem>>)
    %71 = arith.truncf %68 : vector<16x256xf32> to vector<16x256xbf16>
    %c0_25 = arith.constant 0 : index
    %c0_26 = arith.constant 0 : index
    %72 = vector.load %arg9[%c0_25, %c0_26] : memref<256x512xbf16, #tpu.memory_space<vmem>>, vector<256x512xbf16>
    %cst_27 = arith.constant dense<0.000000e+00> : vector<16x512xf32>
    %73 = tpu.matmul %71, %72, %cst_27 {dimension_numbers = #tpu.dot_dimension_numbers<[1], [0], [0], [1], [0, 0, 1, 1], [], []>} : vector<16x256xbf16>, vector<256x512xbf16>, vector<16x512xf32> -> vector<16x512xf32>
    %c4 = arith.constant 4 : index
    %c0_28 = arith.constant 0 : index
    %74 = vector.load %arg2[%c4, %c0_28] : memref<16x1024xf32, #tpu.memory_space<vmem>>, vector<1x512xf32>
    %c5 = arith.constant 5 : index
    %c0_29 = arith.constant 0 : index
    %75 = vector.load %arg2[%c5, %c0_29] : memref<16x1024xf32, #tpu.memory_space<vmem>>, vector<1x512xf32>
    %cst_30 = arith.constant dense<0.000000e+00> : vector<512xf32>
    %76 = vector.multi_reduction <add>, %73, %cst_30 [0] : vector<16x512xf32> to vector<512xf32>
    %77 = vector.shape_cast %76 : vector<512xf32> to vector<1x512xf32>
    %cst_31 = arith.constant 1.600000e+01 : f32
    %78 = vector.broadcast %cst_31 : f32 to vector<1x512xf32>
    %79 = arith.divf %77, %78 : vector<1x512xf32>
    %80 = arith.mulf %73, %73 : vector<16x512xf32>
    %cst_32 = arith.constant dense<0.000000e+00> : vector<512xf32>
    %81 = vector.multi_reduction <add>, %80, %cst_32 [0] : vector<16x512xf32> to vector<512xf32>
    %82 = vector.shape_cast %81 : vector<512xf32> to vector<1x512xf32>
    %cst_33 = arith.constant 1.600000e+01 : f32
    %83 = vector.broadcast %cst_33 : f32 to vector<1x512xf32>
    %84 = arith.divf %82, %83 : vector<1x512xf32>
    %85 = arith.mulf %79, %79 : vector<1x512xf32>
    %86 = arith.subf %84, %85 : vector<1x512xf32>
    %cst_34 = arith.constant 9.99999974E-6 : f32
    %87 = vector.broadcast %cst_34 : f32 to vector<1x512xf32>
    %88 = arith.addf %86, %87 : vector<1x512xf32>
    %89 = math.rsqrt %88 : vector<1x512xf32>
    %90 = arith.mulf %74, %89 : vector<1x512xf32>
    %91 = arith.mulf %79, %90 : vector<1x512xf32>
    %92 = arith.subf %75, %91 : vector<1x512xf32>
    %93 = vector.broadcast %90 : vector<1x512xf32> to vector<16x512xf32>
    %94 = arith.mulf %73, %93 : vector<16x512xf32>
    %95 = vector.broadcast %92 : vector<1x512xf32> to vector<16x512xf32>
    %96 = arith.addf %94, %95 : vector<16x512xf32>
    %cst_35 = arith.constant 2.000000e-01 : f32
    %97 = vector.broadcast %cst_35 : f32 to vector<16x512xf32>
    %98 = arith.mulf %97, %96 : vector<16x512xf32>
    %99 = arith.maximumf %96, %98 : vector<16x512xf32>
    %c2_i32_36 = arith.constant 2 : i32
    %100 = tpu.memref_slice %arg12[%c2_i32_36] : memref<4x!tpu.dma_semaphore, #tpu.memory_space<semaphore_mem>> -> memref<1x!tpu.dma_semaphore, #tpu.memory_space<semaphore_mem>>
    %101 = tpu.memref_squeeze %100 : memref<1x!tpu.dma_semaphore, #tpu.memory_space<semaphore_mem>> -> memref<!tpu.dma_semaphore, #tpu.memory_space<semaphore_mem>>
    tpu.wait_dma2 semaphore(%101 : memref<!tpu.dma_semaphore, #tpu.memory_space<semaphore_mem>>) src(%arg5 : memref<512x1024xbf16, #tpu.memory_space<any>>) dst(%arg10 : memref<512x1024xbf16, #tpu.memory_space<vmem>>)
    %102 = arith.truncf %99 : vector<16x512xf32> to vector<16x512xbf16>
    %c0_37 = arith.constant 0 : index
    %c0_38 = arith.constant 0 : index
    %103 = vector.load %arg10[%c0_37, %c0_38] : memref<512x1024xbf16, #tpu.memory_space<vmem>>, vector<512x1024xbf16>
    %cst_39 = arith.constant dense<0.000000e+00> : vector<16x1024xf32>
    %104 = tpu.matmul %102, %103, %cst_39 {dimension_numbers = #tpu.dot_dimension_numbers<[1], [0], [0], [1], [0, 0, 1, 1], [], []>} : vector<16x512xbf16>, vector<512x1024xbf16>, vector<16x1024xf32> -> vector<16x1024xf32>
    %c6 = arith.constant 6 : index
    %c0_40 = arith.constant 0 : index
    %105 = vector.load %arg2[%c6, %c0_40] : memref<16x1024xf32, #tpu.memory_space<vmem>>, vector<1x1024xf32>
    %c7 = arith.constant 7 : index
    %c0_41 = arith.constant 0 : index
    %106 = vector.load %arg2[%c7, %c0_41] : memref<16x1024xf32, #tpu.memory_space<vmem>>, vector<1x1024xf32>
    %cst_42 = arith.constant dense<0.000000e+00> : vector<1024xf32>
    %107 = vector.multi_reduction <add>, %104, %cst_42 [0] : vector<16x1024xf32> to vector<1024xf32>
    %108 = vector.shape_cast %107 : vector<1024xf32> to vector<1x1024xf32>
    %cst_43 = arith.constant 1.600000e+01 : f32
    %109 = vector.broadcast %cst_43 : f32 to vector<1x1024xf32>
    %110 = arith.divf %108, %109 : vector<1x1024xf32>
    %111 = arith.mulf %104, %104 : vector<16x1024xf32>
    %cst_44 = arith.constant dense<0.000000e+00> : vector<1024xf32>
    %112 = vector.multi_reduction <add>, %111, %cst_44 [0] : vector<16x1024xf32> to vector<1024xf32>
    %113 = vector.shape_cast %112 : vector<1024xf32> to vector<1x1024xf32>
    %cst_45 = arith.constant 1.600000e+01 : f32
    %114 = vector.broadcast %cst_45 : f32 to vector<1x1024xf32>
    %115 = arith.divf %113, %114 : vector<1x1024xf32>
    %116 = arith.mulf %110, %110 : vector<1x1024xf32>
    %117 = arith.subf %115, %116 : vector<1x1024xf32>
    %cst_46 = arith.constant 9.99999974E-6 : f32
    %118 = vector.broadcast %cst_46 : f32 to vector<1x1024xf32>
    %119 = arith.addf %117, %118 : vector<1x1024xf32>
    %120 = math.rsqrt %119 : vector<1x1024xf32>
    %121 = arith.mulf %105, %120 : vector<1x1024xf32>
    %122 = arith.mulf %110, %121 : vector<1x1024xf32>
    %123 = arith.subf %106, %122 : vector<1x1024xf32>
    %124 = vector.broadcast %121 : vector<1x1024xf32> to vector<16x1024xf32>
    %125 = arith.mulf %104, %124 : vector<16x1024xf32>
    %126 = vector.broadcast %123 : vector<1x1024xf32> to vector<16x1024xf32>
    %127 = arith.addf %125, %126 : vector<16x1024xf32>
    %cst_47 = arith.constant 2.000000e-01 : f32
    %128 = vector.broadcast %cst_47 : f32 to vector<16x1024xf32>
    %129 = arith.mulf %128, %127 : vector<16x1024xf32>
    %130 = arith.maximumf %127, %129 : vector<16x1024xf32>
    %c3_i32_48 = arith.constant 3 : i32
    %131 = tpu.memref_slice %arg12[%c3_i32_48] : memref<4x!tpu.dma_semaphore, #tpu.memory_space<semaphore_mem>> -> memref<1x!tpu.dma_semaphore, #tpu.memory_space<semaphore_mem>>
    %132 = tpu.memref_squeeze %131 : memref<1x!tpu.dma_semaphore, #tpu.memory_space<semaphore_mem>> -> memref<!tpu.dma_semaphore, #tpu.memory_space<semaphore_mem>>
    tpu.wait_dma2 semaphore(%132 : memref<!tpu.dma_semaphore, #tpu.memory_space<semaphore_mem>>) src(%arg6 : memref<1024x256xbf16, #tpu.memory_space<any>>) dst(%arg11 : memref<1024x256xbf16, #tpu.memory_space<vmem>>)
    %133 = arith.truncf %130 : vector<16x1024xf32> to vector<16x1024xbf16>
    %c0_49 = arith.constant 0 : index
    %c0_50 = arith.constant 0 : index
    %134 = vector.load %arg11[%c0_49, %c0_50] : memref<1024x256xbf16, #tpu.memory_space<vmem>>, vector<1024x256xbf16>
    %cst_51 = arith.constant dense<0.000000e+00> : vector<16x256xf32>
    %135 = tpu.matmul %133, %134, %cst_51 {dimension_numbers = #tpu.dot_dimension_numbers<[1], [0], [0], [1], [0, 0, 1, 1], [], []>} : vector<16x1024xbf16>, vector<1024x256xbf16>, vector<16x256xf32> -> vector<16x256xf32>
    %c8 = arith.constant 8 : index
    %c0_52 = arith.constant 0 : index
    %136 = vector.load %arg2[%c8, %c0_52] : memref<16x1024xf32, #tpu.memory_space<vmem>>, vector<1x256xf32>
    %137 = vector.broadcast %136 : vector<1x256xf32> to vector<16x256xf32>
    %138 = arith.addf %135, %137 : vector<16x256xf32>
    %139 = math.tanh %138 : vector<16x256xf32>
    %c0_53 = arith.constant 0 : index
    %c0_54 = arith.constant 0 : index
    %140 = vector.load %arg7[%c0_53, %c0_54] : memref<16x256xf32, #tpu.memory_space<vmem>>, vector<16x256xf32>
    tpu.vector_store %arg7[%c0_53, %c0_54], %139 {strides = array<i32>} : memref<16x256xf32, #tpu.memory_space<vmem>>, vector<16x256xf32>,
    return
  }
}

</mosaic_0001>

<llo_original>
// kernel: tpu_custom_call.1
$region0: #{tpu_custom_call.1}
  #allocation0 [shape = 'u32[]', space=smem, size = 0x4, offset = 0x4, fixed_abs, tag = 'smem constant byte address 0x4 - core index']
  #allocation1 [shape = 'u32[144,128]{1,0:T(1,128)}', space=vmem, size = 0x12000, scoped, tag = 'internal scratch']
  #allocation2 [shape = 'bf16[128,256]{1,0:T(16,128)(2,1)}', space=vmem, size = 0x10000, scoped, tag = 'scratch operand']
  #allocation3 [shape = 'bf16[256,512]{1,0:T(16,128)(2,1)}', space=vmem, size = 0x40000, scoped, tag = 'scratch operand']
  #allocation4 [shape = 'bf16[512,1024]{1,0:T(16,128)(2,1)}', space=vmem, size = 0x100000, scoped, tag = 'scratch operand']
  #allocation5 [shape = 'bf16[1024,256]{1,0:T(16,128)(2,1)}', space=vmem, size = 0x80000, scoped, tag = 'scratch operand']
  #allocation6 [shape = 's32[4]{0}', space=sflag, size = 0x10, scoped, tag = 'scratch operand']
  #allocation14 [shape = 's32[]', space=sflag, size = 0x4, offset = 0, fixed_abs, tag = 'sflag constant byte address 0x0 - dummy sync flag']
  #allocation16 [shape = 's32[]', space=sflag, size = 0x4, offset = 0, fixed_abs, tag = 'sflag constant byte address 0x0 - dummy sync flag']
  #allocation18 [shape = 's32[]', space=sflag, size = 0x4, offset = 0, fixed_abs, tag = 'sflag constant byte address 0x0 - dummy sync flag']
  #allocation20 [shape = 's32[]', space=sflag, size = 0x4, offset = 0, fixed_abs, tag = 'sflag constant byte address 0x0 - dummy sync flag']
  %s0 = inlined_call_operand.hbm [shape: f32[16,128], index: 0, kind: input, shape index: {}]
  %s1 = inlined_call_operand.hbm [shape: bf16[128,128], index: 1, kind: input, shape index: {}]
  %s2 = inlined_call_operand.hbm [shape: f32[16,1024], index: 2, kind: input, shape index: {}]
  %s3 = inlined_call_operand.hbm [shape: bf16[128,256], index: 3, kind: input, shape index: {}]
  %s4 = inlined_call_operand.hbm [shape: bf16[256,512], index: 4, kind: input, shape index: {}]
  %s5 = inlined_call_operand.hbm [shape: bf16[512,1024], index: 5, kind: input, shape index: {}]
  %s6 = inlined_call_operand.hbm [shape: bf16[1024,256], index: 6, kind: input, shape index: {}]
  %s7 = inlined_call_operand.hbm [shape: f32[16,256], index: 7, kind: output, shape index: {}]
  %s8 = sld [smem:[#allocation0]]
  $region34: #{tpu_custom_call.1} parent=0
    _
  %s10 = ssub.s32 1, %s8
  %s11 = scalar_select 0, %s10, %s8
  $region1: #{tpu_custom_call.1} parent=0
    #allocation7 [shape = 'u8[8192]{0}', space=vmem, size = 0x2000, scoped, tag = 'input window, operand 0, single buffered']
    #allocation8 [shape = 's32[1]{0}', space=sflag, size = 0x4, scoped, tag = 'scoped memory for tpu_custom_call.1']
    #allocation9 [shape = 's32[1]{0}', space=sflag, size = 0x4, scoped, tag = 'scoped memory for tpu_custom_call.1']
    #allocation10 [shape = 'u8[32768]{0}', space=vmem, size = 0x8000, scoped, tag = 'input window, operand 1, single buffered']
    #allocation11 [shape = 's32[1]{0}', space=sflag, size = 0x4, scoped, tag = 'scoped memory for tpu_custom_call.1']
    #allocation12 [shape = 'u8[65536]{0}', space=vmem, size = 0x10000, scoped, tag = 'input window, operand 2, single buffered']
    #allocation13 [shape = 'u8[16384]{0}', space=vmem, size = 0x4000, scoped, tag = 'output window, operand 0, single buffered']
    #allocation15 [shape = 'u32[9]{0}', space=smem, size = 0x24, scoped, tag = 'DMA stride descriptor']
    #allocation17 [shape = 'u32[9]{0}', space=smem, size = 0x24, scoped, tag = 'DMA stride descriptor']
    #allocation19 [shape = 'u32[9]{0}', space=smem, size = 0x24, scoped, tag = 'DMA stride descriptor']
    #allocation21 [shape = 'u32[9]{0}', space=smem, size = 0x24, scoped, tag = 'DMA stride descriptor']
    %12 = vsyncpa [#allocation8], 0
    %13 = vsyncpa [#allocation11], 0
    %14 = vsyncpa [#allocation9], 0
    // Predicated region
    $region2: #{tpu_custom_call.1} parent=1 // pred_check
      _
    $region3: #{tpu_custom_call.1} parent=1 // pred_check_branch
      %16 = sbr.rel (0) target = $region5
    $region4: #{tpu_custom_call.1} parent=1 // pred_region
      %s18 = ssub.s32 256, 256
      %19 = vsyncadd [#allocation8], %s18
      %s20 = sshll.u32 [#allocation7], 4
      %s21 = int_to_ptr.vmem [resolvable:$true] %s20
      %26 = dma.hbm_to_vmem [thread:$0]  %s0, 256, %s21, [#allocation8], 128, 128, 8
    $region5: #{tpu_custom_call.1} parent=1 // pred_fallthru
      _
    // Predicated region
    $region6: #{tpu_custom_call.1} parent=1 // pred_check
      _
    $region7: #{tpu_custom_call.1} parent=1 // pred_check_branch
      %28 = sbr.rel (0) target = $region9
    $region8: #{tpu_custom_call.1} parent=1 // pred_region
      %s30 = ssub.s32 1024, 1024
      %31 = vsyncadd [#allocation11], %s30
      %s32 = sshll.u32 [#allocation10], 4
      %s33 = int_to_ptr.vmem [resolvable:$true] %s32
      %38 = dma.hbm_to_vmem [thread:$0]  %s1, 1024, %s33, [#allocation11], 64, 64, 4
    $region9: #{tpu_custom_call.1} parent=1 // pred_fallthru
      _
    // Predicated region
    $region10: #{tpu_custom_call.1} parent=1 // pred_check
      _
    $region11: #{tpu_custom_call.1} parent=1 // pred_check_branch
      %40 = sbr.rel (0) target = $region13
    $region12: #{tpu_custom_call.1} parent=1 // pred_region
      %s42 = ssub.s32 2048, 2048
      %43 = vsyncadd [#allocation11], %s42
      %s44 = sshll.u32 [#allocation12], 4
      %s45 = int_to_ptr.vmem [resolvable:$true] %s44
      %50 = dma.hbm_to_vmem [thread:$0]  %s2, 2048, %s45, [#allocation11], 1024, 1024, 64
    $region13: #{tpu_custom_call.1} parent=1 // pred_fallthru
      _
    // Predicated region
    $region14: #{tpu_custom_call.1} parent=1 // pred_check
      _
    $region15: #{tpu_custom_call.1} parent=1 // pred_check_branch
      %52 = sbr.rel (0) target = $region17
    $region16: #{tpu_custom_call.1} parent=1 // pred_region
      %53 = dma.done [#allocation8], 256
    $region17: #{tpu_custom_call.1} parent=1 // pred_fallthru
      _
    // Predicated region
    $region18: #{tpu_custom_call.1} parent=1 // pred_check
      _
    $region19: #{tpu_custom_call.1} parent=1 // pred_check_branch
      %55 = sbr.rel (0) target = $region21
    $region20: #{tpu_custom_call.1} parent=1 // pred_region
      %56 = dma.done [#allocation11], 1024
    $region21: #{tpu_custom_call.1} parent=1 // pred_fallthru
      _
    // Predicated region
    $region22: #{tpu_custom_call.1} parent=1 // pred_check
      _
    $region23: #{tpu_custom_call.1} parent=1 // pred_check_branch
      %58 = sbr.rel (0) target = $region25
    $region24: #{tpu_custom_call.1} parent=1 // pred_region
      %59 = dma.done [#allocation11], 2048
    $region25: #{tpu_custom_call.1} parent=1 // pred_fallthru
      _
    %s62 = sshll.u32 1, 14
    %s63 = sxor.u32 4294967295, %s62
    %s65 = sld [smem:[#allocation0]]
    %s66 = sadd.s32 2, %s65
    %s68 = sshll.u32 7, 26
    %s69 = sxor.u32 4294967295, %s68
    %s70 = sand.u32 0, %s69
    %s71 = sshll.u32 %s66, 26
    %s72 = sor.u32 %s70, %s71
    %s73 = sshll.u32 [#allocation2], 4
    %s74 = int_to_ptr.vmem [resolvable:$true] %s73
    %77 = sst [smem:[#allocation15]] 256
    %s78 = scalar_lea.smem [#allocation15], 1
    %79 = sst [smem:[%s78]] 256
    %s80 = scalar_lea.smem [#allocation15], 2
    %81 = sst [smem:[%s80]] 2
    %s82 = scalar_lea.smem [#allocation15], 3
    %83 = sst [smem:[%s82]] 64
    %s84 = scalar_lea.smem [#allocation15], 4
    %85 = sst [smem:[%s84]] 128
    %s86 = scalar_lea.smem [#allocation15], 5
    %87 = sst [smem:[%s86]] 2
    %s88 = scalar_lea.smem [#allocation15], 6
    %89 = sst [smem:[%s88]] 128
    %s90 = scalar_lea.smem [#allocation15], 7
    %91 = sst [smem:[%s90]] 64
    %s92 = scalar_lea.smem [#allocation15], 8
    %93 = sst [smem:[%s92]] 4
    %95 = dma.general %s3, 2048, %s74, [#allocation6], [#allocation14], [#allocation15], %s72, 0
    %s96 = scalar_lea.sflag [#allocation6], 1
    %s98 = sshll.u32 1, 14
    %s99 = sxor.u32 4294967295, %s98
    %s101 = sadd.s32 2, %s65
    %s103 = sshll.u32 7, 26
    %s104 = sxor.u32 4294967295, %s103
    %s105 = sand.u32 0, %s104
    %s106 = sshll.u32 %s101, 26
    %s107 = sor.u32 %s105, %s106
    %s108 = sshll.u32 [#allocation3], 4
    %s109 = int_to_ptr.vmem [resolvable:$true] %s108
    %112 = sst [smem:[#allocation17]] 512
    %s113 = scalar_lea.smem [#allocation17], 1
    %114 = sst [smem:[%s113]] 512
    %s115 = scalar_lea.smem [#allocation17], 2
    %116 = sst [smem:[%s115]] 4
    %s117 = scalar_lea.smem [#allocation17], 3
    %118 = sst [smem:[%s117]] 64
    %s119 = scalar_lea.smem [#allocation17], 4
    %120 = sst [smem:[%s119]] 128
    %s121 = scalar_lea.smem [#allocation17], 5
    %122 = sst [smem:[%s121]] 2
    %s123 = scalar_lea.smem [#allocation17], 6
    %124 = sst [smem:[%s123]] 256
    %s125 = scalar_lea.smem [#allocation17], 7
    %126 = sst [smem:[%s125]] 64
    %s127 = scalar_lea.smem [#allocation17], 8
    %128 = sst [smem:[%s127]] 4
    %130 = dma.general %s4, 8192, %s109, %s96, [#allocation16], [#allocation17], %s107, 0
    %s131 = scalar_lea.sflag [#allocation6], 2
    %s133 = sshll.u32 1, 14
    %s134 = sxor.u32 4294967295, %s133
    %s136 = sadd.s32 2, %s65
    %s138 = sshll.u32 7, 26
    %s139 = sxor.u32 4294967295, %s138
    %s140 = sand.u32 0, %s139
    %s141 = sshll.u32 %s136, 26
    %s142 = sor.u32 %s140, %s141
    %s143 = sshll.u32 [#allocation4], 4
    %s144 = int_to_ptr.vmem [resolvable:$true] %s143
    %147 = sst [smem:[#allocation19]] 1024
    %s148 = scalar_lea.smem [#allocation19], 1
    %149 = sst [smem:[%s148]] 1024
    %s150 = scalar_lea.smem [#allocation19], 2
    %151 = sst [smem:[%s150]] 8
    %s152 = scalar_lea.smem [#allocation19], 3
    %153 = sst [smem:[%s152]] 64
    %s154 = scalar_lea.smem [#allocation19], 4
    %155 = sst [smem:[%s154]] 128
    %s156 = scalar_lea.smem [#allocation19], 5
    %157 = sst [smem:[%s156]] 2
    %s158 = scalar_lea.smem [#allocation19], 6
    %159 = sst [smem:[%s158]] 512
    %s160 = scalar_lea.smem [#allocation19], 7
    %161 = sst [smem:[%s160]] 64
    %s162 = scalar_lea.smem [#allocation19], 8
    %163 = sst [smem:[%s162]] 4
    %165 = dma.general %s5, 32768, %s144, %s131, [#allocation18], [#allocation19], %s142, 0
    %s166 = scalar_lea.sflag [#allocation6], 3
    %s168 = sshll.u32 1, 14
    %s169 = sxor.u32 4294967295, %s168
    %s171 = sadd.s32 2, %s65
    %s173 = sshll.u32 7, 26
    %s174 = sxor.u32 4294967295, %s173
    %s175 = sand.u32 0, %s174
    %s176 = sshll.u32 %s171, 26
    %s177 = sor.u32 %s175, %s176
    %s178 = sshll.u32 [#allocation5], 4
    %s179 = int_to_ptr.vmem [resolvable:$true] %s178
    %182 = sst [smem:[#allocation21]] 256
    %s183 = scalar_lea.smem [#allocation21], 1
    %184 = sst [smem:[%s183]] 256
    %s185 = scalar_lea.smem [#allocation21], 2
    %186 = sst [smem:[%s185]] 2
    %s187 = scalar_lea.smem [#allocation21], 3
    %188 = sst [smem:[%s187]] 64
    %s189 = scalar_lea.smem [#allocation21], 4
    %190 = sst [smem:[%s189]] 128
    %s191 = scalar_lea.smem [#allocation21], 5
    %192 = sst [smem:[%s191]] 2
    %s193 = scalar_lea.smem [#allocation21], 6
    %194 = sst [smem:[%s193]] 128
    %s195 = scalar_lea.smem [#allocation21], 7
    %196 = sst [smem:[%s195]] 64
    %s197 = scalar_lea.smem [#allocation21], 8
    %198 = sst [smem:[%s197]] 4
    %200 = dma.general %s6, 16384, %s179, %s166, [#allocation20], [#allocation21], %s177, 0
    %v201 = vld [vmem:[#allocation7] sm:$0xff]
    %v202 = vld [vmem:[#allocation7 + $0x8] sm:$0xff]
    %v203 = vpack.c.bf16 %v202, %v201
    %v204 = vld [vmem:[#allocation10] sm:$0xf]
    %v205 = vld [vmem:[#allocation10 + $0x4] sm:$0xf]
    %v206 = vld [vmem:[#allocation10 + $0x8] sm:$0xf]
    %v207 = vld [vmem:[#allocation10 + $0xc] sm:$0xf]
    %v208 = vld [vmem:[#allocation10 + $0x10] sm:$0xf]
    %v209 = vld [vmem:[#allocation10 + $0x14] sm:$0xf]
    %v210 = vld [vmem:[#allocation10 + $0x18] sm:$0xf]
    %v211 = vld [vmem:[#allocation10 + $0x1c] sm:$0xf]
    %v212 = vld [vmem:[#allocation10 + $0x20] sm:$0xf]
    %v213 = vld [vmem:[#allocation10 + $0x24] sm:$0xf]
    %v214 = vld [vmem:[#allocation10 + $0x28] sm:$0xf]
    %v215 = vld [vmem:[#allocation10 + $0x2c] sm:$0xf]
    %v216 = vld [vmem:[#allocation10 + $0x30] sm:$0xf]
    %v217 = vld [vmem:[#allocation10 + $0x34] sm:$0xf]
    %v218 = vld [vmem:[#allocation10 + $0x38] sm:$0xf]
    %v219 = vld [vmem:[#allocation10 + $0x3c] sm:$0xf]
    %v236 = vunpack.c.l.b16 %v204
    %v237 = vunpack.c.l.b16 %v205
    %v238 = vunpack.c.l.b16 %v206
    %v239 = vunpack.c.l.b16 %v207
    %v240 = vunpack.c.l.b16 %v208
    %v241 = vunpack.c.l.b16 %v209
    %v242 = vunpack.c.l.b16 %v210
    %v243 = vunpack.c.l.b16 %v211
    %v244 = vunpack.c.l.b16 %v212
    %v245 = vunpack.c.l.b16 %v213
    %v246 = vunpack.c.l.b16 %v214
    %v247 = vunpack.c.l.b16 %v215
    %v248 = vunpack.c.l.b16 %v216
    %v249 = vunpack.c.l.b16 %v217
    %v250 = vunpack.c.l.b16 %v218
    %v251 = vunpack.c.l.b16 %v219
    %v252 = vpack.c.b16 %v237, %v236
    %v253 = vpack.c.b16 %v239, %v238
    %v254 = vpack.c.b16 %v241, %v240
    %v255 = vpack.c.b16 %v243, %v242
    %v256 = vpack.c.b16 %v245, %v244
    %v257 = vpack.c.b16 %v247, %v246
    %v258 = vpack.c.b16 %v249, %v248
    %v259 = vpack.c.b16 %v251, %v250
    %268 = vmatprep.subr.bf16.mxu0 0
    %269 = vmatpush1.bf16.msra.mxu0 %v252
    %270 = vmatprep.subr.bf16.mxu0 0
    %271 = vmatpush1.bf16.msra.mxu0 %v253
    %272 = vmatprep.subr.bf16.mxu0 0
    %273 = vmatpush1.bf16.msra.mxu0 %v254
    %274 = vmatprep.subr.bf16.mxu0 0
    %275 = vmatpush1.bf16.msra.mxu0 %v255
    %276 = vmatprep.subr.bf16.mxu0 0
    %277 = vmatpush1.bf16.msra.mxu0 %v256
    %278 = vmatprep.subr.bf16.mxu0 0
    %279 = vmatpush1.bf16.msra.mxu0 %v257
    %280 = vmatprep.subr.bf16.mxu0 0
    %281 = vmatpush1.bf16.msra.mxu0 %v258
    %282 = vmatprep.subr.bf16.mxu0 0
    %283 = vmatpush1.bf16.msra.mxu0 %v259
    %284 = vmatprep.subr.bf16.mxu0 0
    %285 = vmatpush1.bf16.msra.mxu0 0
    %286 = vmatprep.subr.bf16.mxu0 0
    %287 = vmatpush1.bf16.msra.mxu0 0
    %288 = vmatprep.subr.bf16.mxu0 0
    %289 = vmatpush1.bf16.msra.mxu0 0
    %290 = vmatprep.subr.bf16.mxu0 0
    %291 = vmatpush1.bf16.msra.mxu0 0
    %292 = vmatprep.subr.bf16.mxu0 0
    %293 = vmatpush1.bf16.msra.mxu0 0
    %294 = vmatprep.subr.bf16.mxu0 0
    %295 = vmatpush1.bf16.msra.mxu0 0
    %296 = vmatprep.subr.bf16.mxu0 0
    %297 = vmatpush1.bf16.msra.mxu0 0
    %298 = vmatprep.subr.bf16.mxu0 0
    %299 = vmatpush1.bf16.msra.mxu0 0
    %300 = vmatprep.mubr.bf16.mxu0 0
    %301 = vmatmul.mubr.bf16.gmra.mrb[0].mxu0 %v203
    %v302 = vpop.f32.mrb[0].mxu0
    %v303 = vadd.f32 0.0, %v302
    %v304 = vpop.f32.mrb[0].mxu0
    %v305 = vpop.f32.mrb[0].mxu0
    %v306 = vadd.f32 0.0, %v305
    %v307 = vpop.f32.mrb[0].mxu0
    %308 = vdwg.mxu0
    %v309 = vld [vmem:[#allocation12] ss:$0 sm:$0xff]
    %v310 = vld [vmem:[#allocation12 + $0x1] ss:$0 sm:$0xff]
    %v311 = vadd.f32 %v303, %v306
    %v312 = vrot.slane %v311, 4
    %v313 = vadd.f32 %v311, %v312
    %v314 = vrot.slane %v313, 2
    %v315 = vadd.f32 %v313, %v314
    %v316 = vrot.slane %v315, 1
    %v317 = vadd.f32 %v315, %v316
    %v318 = vrcp.pop 16.0
    %v319 = vmul.f32 %v317, %v318
    %v320 = vmul.f32 %v303, %v303
    %v321 = vmul.f32 %v306, %v306
    %v322 = vadd.f32 %v320, %v321
    %v323 = vrot.slane %v322, 4
    %v324 = vadd.f32 %v322, %v323
    %v325 = vrot.slane %v324, 2
    %v326 = vadd.f32 %v324, %v325
    %v327 = vrot.slane %v326, 1
    %v328 = vadd.f32 %v326, %v327
    %v329 = vmul.f32 %v328, %v318
    %v330 = vmul.f32 %v319, %v319
    %v331 = vsub.f32 %v329, %v330
    %v332 = vadd.f32 %v331, 1e-05
    %v333 = vrsqrt.pop %v332
    %v334 = vmul.f32 %v309, %v333
    %v335 = vmul.f32 %v319, %v334
    %v336 = vsub.f32 %v310, %v335
    %v337 = vmul.f32 %v303, %v334
    %v338 = vmul.f32 %v306, %v334
    %v339 = vadd.f32 %v337, %v336
    %v340 = vadd.f32 %v338, %v336
    %v341 = vmul.f32 %v339, 0.2
    %v342 = vmul.f32 %v340, 0.2
    %v343 = vmax.f32 %v339, %v341
    %v344 = vmax.f32 %v340, %v342
    %s345 = smul.u32 4, 16
    %s346 = smul.u32 %s345, 2
    %s347 = sshll.u32 %s346, 4
    %348 = dma.done [#allocation6], %s347
    %v349 = vpack.c.bf16 %v344, %v343
    %v350 = vld [vmem:[#allocation2] sm:$0xff]
    %v351 = vld [vmem:[#allocation2 + $0x8] sm:$0xff]
    %v352 = vld [vmem:[#allocation2 + $0x10] sm:$0xff]
    %v353 = vld [vmem:[#allocation2 + $0x18] sm:$0xff]
    %v354 = vld [vmem:[#allocation2 + $0x20] sm:$0xff]
    %v355 = vld [vmem:[#allocation2 + $0x28] sm:$0xff]
    %v356 = vld [vmem:[#allocation2 + $0x30] sm:$0xff]
    %v357 = vld [vmem:[#allocation2 + $0x38] sm:$0xff]
    %v358 = vld [vmem:[#allocation2 + $0x40] sm:$0xff]
    %v359 = vld [vmem:[#allocation2 + $0x48] sm:$0xff]
    %v360 = vld [vmem:[#allocation2 + $0x50] sm:$0xff]
    %v361 = vld [vmem:[#allocation2 + $0x58] sm:$0xff]
    %v362 = vld [vmem:[#allocation2 + $0x60] sm:$0xff]
    %v363 = vld [vmem:[#allocation2 + $0x68] sm:$0xff]
    %v364 = vld [vmem:[#allocation2 + $0x70] sm:$0xff]
    %v365 = vld [vmem:[#allocation2 + $0x78] sm:$0xff]
    %366 = vmatprep.subr.bf16.mxu0 %v351
    %367 = vmatpush1.bf16.msra.mxu0 %v350
    %368 = vmatprep.subr.bf16.mxu0 %v353
    %369 = vmatpush1.bf16.msra.mxu0 %v352
    %370 = vmatprep.subr.bf16.mxu0 %v355
    %371 = vmatpush1.bf16.msra.mxu0 %v354
    %372 = vmatprep.subr.bf16.mxu0 %v357
    %373 = vmatpush1.bf16.msra.mxu0 %v356
    %374 = vmatprep.subr.bf16.mxu0 %v359
    %375 = vmatpush1.bf16.msra.mxu0 %v358
    %376 = vmatprep.subr.bf16.mxu0 %v361
    %377 = vmatpush1.bf16.msra.mxu0 %v360
    %378 = vmatprep.subr.bf16.mxu0 %v363
    %379 = vmatpush1.bf16.msra.mxu0 %v362
    %380 = vmatprep.subr.bf16.mxu0 %v365
    %381 = vmatpush1.bf16.msra.mxu0 %v364
    %382 = vmatprep.subr.bf16.mxu0 0
    %383 = vmatpush1.bf16.msra.mxu0 0
    %384 = vmatprep.subr.bf16.mxu0 0
    %385 = vmatpush1.bf16.msra.mxu0 0
    %386 = vmatprep.subr.bf16.mxu0 0
    %387 = vmatpush1.bf16.msra.mxu0 0
    %388 = vmatprep.subr.bf16.mxu0 0
    %389 = vmatpush1.bf16.msra.mxu0 0
    %390 = vmatprep.subr.bf16.mxu0 0
    %391 = vmatpush1.bf16.msra.mxu0 0
    %392 = vmatprep.subr.bf16.mxu0 0
    %393 = vmatpush1.bf16.msra.mxu0 0
    %394 = vmatprep.subr.bf16.mxu0 0
    %395 = vmatpush1.bf16.msra.mxu0 0
    %396 = vmatprep.subr.bf16.mxu0 0
    %397 = vmatpush1.bf16.msra.mxu0 0
    %398 = vmatprep.mubr.bf16.mxu0 0
    %399 = vmatmul.mubr.bf16.gmra.mrb[0].mxu0 %v349
    %v400 = vpop.f32.mrb[0].mxu0
    %v401 = vadd.f32 0.0, %v400
    %v402 = vpop.f32.mrb[0].mxu0
    %v403 = vadd.f32 0.0, %v402
    %v404 = vpop.f32.mrb[0].mxu0
    %v405 = vadd.f32 0.0, %v404
    %v406 = vpop.f32.mrb[0].mxu0
    %v407 = vadd.f32 0.0, %v406
    %408 = vdwg.mxu0
    %s409 = scalar_lea.vmem [#allocation12], 2
    %v410 = vld [vmem:[%s409] ss:$8 sm:$0x3]
    %s411 = scalar_lea.vmem [#allocation12], 3
    %v412 = vld [vmem:[%s411] ss:$8 sm:$0x3]
    %v413 = vadd.f32 %v401, %v405
    %v414 = vrot.slane %v413, 4
    %v415 = vadd.f32 %v413, %v414
    %v416 = vrot.slane %v415, 2
    %v417 = vadd.f32 %v415, %v416
    %v418 = vrot.slane %v417, 1
    %v419 = vadd.f32 %v417, %v418
    %v420 = vadd.f32 %v403, %v407
    %v421 = vrot.slane %v420, 4
    %v422 = vadd.f32 %v420, %v421
    %v423 = vrot.slane %v422, 2
    %v424 = vadd.f32 %v422, %v423
    %v425 = vrot.slane %v424, 1
    %v426 = vadd.f32 %v424, %v425
    %v427 = vmul.f32 %v419, %v318
    %v428 = vmul.f32 %v426, %v318
    %v429 = vmul.f32 %v401, %v401
    %v430 = vmul.f32 %v403, %v403
    %v431 = vmul.f32 %v405, %v405
    %v432 = vmul.f32 %v407, %v407
    %v433 = vadd.f32 %v429, %v431
    %v434 = vrot.slane %v433, 4
    %v435 = vadd.f32 %v433, %v434
    %v436 = vrot.slane %v435, 2
    %v437 = vadd.f32 %v435, %v436
    %v438 = vrot.slane %v437, 1
    %v439 = vadd.f32 %v437, %v438
    %v440 = vadd.f32 %v430, %v432
    %v441 = vrot.slane %v440, 4
    %v442 = vadd.f32 %v440, %v441
    %v443 = vrot.slane %v442, 2
    %v444 = vadd.f32 %v442, %v443
    %v445 = vrot.slane %v444, 1
    %v446 = vadd.f32 %v444, %v445
    %v447 = vmul.f32 %v439, %v318
    %v448 = vmul.f32 %v446, %v318
    %v449 = vmul.f32 %v427, %v427
    %v450 = vmul.f32 %v428, %v428
    %v451 = vsub.f32 %v447, %v449
    %v452 = vsub.f32 %v448, %v450
    %v453 = vadd.f32 %v451, 1e-05
    %v454 = vadd.f32 %v452, 1e-05
    %v455 = vrsqrt.pop %v453
    %v456 = vrsqrt.pop %v454
    %v459 = vcombine.low %v455, %v456
    %v461 = vunpack.c.l.s4 1966171168
    %v462 = vunpack.c.0.s8 %v461
    %v463 = vlaneseq
    %v464 = vshrl.u32 %v463, 7
    %v465 = vsub.s32 %v462, %v464
    %v466 = vrot.slane %v459, %v465
    %v468 = vunpack.c.l.s4 1966171168
    %v469 = vunpack.c.0.s8 %v468
    %v470 = vlaneseq
    %v471 = vshrl.u32 %v470, 7
    %v472 = vsub.s32 %v469, %v471
    %v473 = vrot.slane %v466, %v472
    %v475 = vmul.f32 %v410, %v473
    %v477 = vlaneseq
    %v478 = vshrl.u32 %v477, 7
    %v479 = vsub.s32 0, %v478
    %v480 = vrot.slane %v475, %v479
    %v481 = vlaneseq
    %v482 = vshrl.u32 %v481, 7
    %v483 = vsub.s32 1, %v482
    %v484 = vrot.slane %v475, %v483
    %v487 = vmul.f32 %v427, %v480
    %v488 = vmul.f32 %v428, %v484
    %v491 = vcombine.low %v487, %v488
    %v493 = vunpack.c.l.s4 1966171168
    %v494 = vunpack.c.0.s8 %v493
    %v495 = vlaneseq
    %v496 = vshrl.u32 %v495, 7
    %v497 = vsub.s32 %v494, %v496
    %v498 = vrot.slane %v491, %v497
    %v500 = vunpack.c.l.s4 1966171168
    %v501 = vunpack.c.0.s8 %v500
    %v502 = vlaneseq
    %v503 = vshrl.u32 %v502, 7
    %v504 = vsub.s32 %v501, %v503
    %v505 = vrot.slane %v498, %v504
    %v507 = vsub.f32 %v412, %v505
    %v508 = vmul.f32 %v401, %v480
    %v509 = vmul.f32 %v403, %v484
    %v510 = vmul.f32 %v405, %v480
    %v511 = vmul.f32 %v407, %v484
    %v513 = vlaneseq
    %v514 = vshrl.u32 %v513, 7
    %v515 = vsub.s32 0, %v514
    %v516 = vrot.slane %v507, %v515
    %v517 = vlaneseq
    %v518 = vshrl.u32 %v517, 7
    %v519 = vsub.s32 1, %v518
    %v520 = vrot.slane %v507, %v519
    %v523 = vadd.f32 %v508, %v516
    %v524 = vadd.f32 %v509, %v520
    %v525 = vadd.f32 %v510, %v516
    %v526 = vadd.f32 %v511, %v520
    %v527 = vmul.f32 %v523, 0.2
    %v528 = vmul.f32 %v524, 0.2
    %v529 = vmul.f32 %v525, 0.2
    %v530 = vmul.f32 %v526, 0.2
    %v531 = vmax.f32 %v523, %v527
    %v532 = vmax.f32 %v524, %v528
    %v533 = vmax.f32 %v525, %v529
    %v534 = vmax.f32 %v526, %v530
    %s535 = smul.u32 4, 32
    %s536 = smul.u32 %s535, 4
    %s537 = sshll.u32 %s536, 4
    %538 = dma.done %s96, %s537
    %v539 = vpack.c.bf16 %v533, %v531
    %v540 = vpack.c.bf16 %v534, %v532
    %v541 = vld [vmem:[#allocation3] sm:$0xff]
    %v542 = vld [vmem:[#allocation3 + $0x8] sm:$0xff]
    %v543 = vld [vmem:[#allocation3 + $0x10] sm:$0xff]
    %v544 = vld [vmem:[#allocation3 + $0x18] sm:$0xff]
    %v545 = vld [vmem:[#allocation3 + $0x20] sm:$0xff]
    %v546 = vld [vmem:[#allocation3 + $0x28] sm:$0xff]
    %v547 = vld [vmem:[#allocation3 + $0x30] sm:$0xff]
    %v548 = vld [vmem:[#allocation3 + $0x38] sm:$0xff]
    %v549 = vld [vmem:[#allocation3 + $0x40] sm:$0xff]
    %v550 = vld [vmem:[#allocation3 + $0x48] sm:$0xff]
    %v551 = vld [vmem:[#allocation3 + $0x50] sm:$0xff]
    %v552 = vld [vmem:[#allocation3 + $0x58] sm:$0xff]
    %v553 = vld [vmem:[#allocation3 + $0x60] sm:$0xff]
    %v554 = vld [vmem:[#allocation3 + $0x68] sm:$0xff]
    %v555 = vld [vmem:[#allocation3 + $0x70] sm:$0xff]
    %v556 = vld [vmem:[#allocation3 + $0x78] sm:$0xff]
    %v557 = vld [vmem:[#allocation3 + $0x80] sm:$0xff]
    %v558 = vld [vmem:[#allocation3 + $0x88] sm:$0xff]
    %v559 = vld [vmem:[#allocation3 + $0x90] sm:$0xff]
    %v560 = vld [vmem:[#allocation3 + $0x98] sm:$0xff]
    %v561 = vld [vmem:[#allocation3 + $0xa0] sm:$0xff]
    %v562 = vld [vmem:[#allocation3 + $0xa8] sm:$0xff]
    %v563 = vld [vmem:[#allocation3 + $0xb0] sm:$0xff]
    %v564 = vld [vmem:[#allocation3 + $0xb8] sm:$0xff]
    %v565 = vld [vmem:[#allocation3 + $0xc0] sm:$0xff]
    %v566 = vld [vmem:[#allocation3 + $0xc8] sm:$0xff]
    %v567 = vld [vmem:[#allocation3 + $0xd0] sm:$0xff]
    %v568 = vld [vmem:[#allocation3 + $0xd8] sm:$0xff]
    %v569 = vld [vmem:[#allocation3 + $0xe0] sm:$0xff]
    %v570 = vld [vmem:[#allocation3 + $0xe8] sm:$0xff]
    %v571 = vld [vmem:[#allocation3 + $0xf0] sm:$0xff]
    %v572 = vld [vmem:[#allocation3 + $0xf8] sm:$0xff]
    %v573 = vld [vmem:[#allocation3 + $0x100] sm:$0xff]
    %v574 = vld [vmem:[#allocation3 + $0x108] sm:$0xff]
    %v575 = vld [vmem:[#allocation3 + $0x110] sm:$0xff]
    %v576 = vld [vmem:[#allocation3 + $0x118] sm:$0xff]
    %v577 = vld [vmem:[#allocation3 + $0x120] sm:$0xff]
    %v578 = vld [vmem:[#allocation3 + $0x128] sm:$0xff]
    %v579 = vld [vmem:[#allocation3 + $0x130] sm:$0xff]
    %v580 = vld [vmem:[#allocation3 + $0x138] sm:$0xff]
    %v581 = vld [vmem:[#allocation3 + $0x140] sm:$0xff]
    %v582 = vld [vmem:[#allocation3 + $0x148] sm:$0xff]
    %v583 = vld [vmem:[#allocation3 + $0x150] sm:$0xff]
    %v584 = vld [vmem:[#allocation3 + $0x158] sm:$0xff]
    %v585 = vld [vmem:[#allocation3 + $0x160] sm:$0xff]
    %v586 = vld [vmem:[#allocation3 + $0x168] sm:$0xff]
    %v587 = vld [vmem:[#allocation3 + $0x170] sm:$0xff]
    %v588 = vld [vmem:[#allocation3 + $0x178] sm:$0xff]
    %v589 = vld [vmem:[#allocation3 + $0x180] sm:$0xff]
    %v590 = vld [vmem:[#allocation3 + $0x188] sm:$0xff]
    %v591 = vld [vmem:[#allocation3 + $0x190] sm:$0xff]
    %v592 = vld [vmem:[#allocation3 + $0x198] sm:$0xff]
    %v593 = vld [vmem:[#allocation3 + $0x1a0] sm:$0xff]
    %v594 = vld [vmem:[#allocation3 + $0x1a8] sm:$0xff]
    %v595 = vld [vmem:[#allocation3 + $0x1b0] sm:$0xff]
    %v596 = vld [vmem:[#allocation3 + $0x1b8] sm:$0xff]
    %v597 = vld [vmem:[#allocation3 + $0x1c0] sm:$0xff]
    %v598 = vld [vmem:[#allocation3 + $0x1c8] sm:$0xff]
    %v599 = vld [vmem:[#allocation3 + $0x1d0] sm:$0xff]
    %v600 = vld [vmem:[#allocation3 + $0x1d8] sm:$0xff]
    %v601 = vld [vmem:[#allocation3 + $0x1e0] sm:$0xff]
    %v602 = vld [vmem:[#allocation3 + $0x1e8] sm:$0xff]
    %v603 = vld [vmem:[#allocation3 + $0x1f0] sm:$0xff]
    %v604 = vld [vmem:[#allocation3 + $0x1f8] sm:$0xff]
    %605 = vmatprep.subr.bf16.mxu0 %v542
    %606 = vmatpush1.bf16.msra.mxu0 %v541
    %607 = vmatprep.subr.bf16.mxu0 %v546
    %608 = vmatpush1.bf16.msra.mxu0 %v545
    %609 = vmatprep.subr.bf16.mxu0 %v550
    %610 = vmatpush1.bf16.msra.mxu0 %v549
    %611 = vmatprep.subr.bf16.mxu0 %v554
    %612 = vmatpush1.bf16.msra.mxu0 %v553
    %613 = vmatprep.subr.bf16.mxu0 %v558
    %614 = vmatpush1.bf16.msra.mxu0 %v557
    %615 = vmatprep.subr.bf16.mxu0 %v562
    %616 = vmatpush1.bf16.msra.mxu0 %v561
    %617 = vmatprep.subr.bf16.mxu0 %v566
    %618 = vmatpush1.bf16.msra.mxu0 %v565
    %619 = vmatprep.subr.bf16.mxu0 %v570
    %620 = vmatpush1.bf16.msra.mxu0 %v569
    %621 = vmatprep.subr.bf16.mxu0 %v574
    %622 = vmatpush1.bf16.msra.mxu0 %v573
    %623 = vmatprep.subr.bf16.mxu0 %v578
    %624 = vmatpush1.bf16.msra.mxu0 %v577
    %625 = vmatprep.subr.bf16.mxu0 %v582
    %626 = vmatpush1.bf16.msra.mxu0 %v581
    %627 = vmatprep.subr.bf16.mxu0 %v586
    %628 = vmatpush1.bf16.msra.mxu0 %v585
    %629 = vmatprep.subr.bf16.mxu0 %v590
    %630 = vmatpush1.bf16.msra.mxu0 %v589
    %631 = vmatprep.subr.bf16.mxu0 %v594
    %632 = vmatpush1.bf16.msra.mxu0 %v593
    %633 = vmatprep.subr.bf16.mxu0 %v598
    %634 = vmatpush1.bf16.msra.mxu0 %v597
    %635 = vmatprep.subr.bf16.mxu0 %v602
    %636 = vmatpush1.bf16.msra.mxu0 %v601
    %637 = vmatprep.mubr.bf16.mxu0 %v540
    %638 = vmatmul.mubr.bf16.gmra.mrb[0].mxu0 %v539
    %v639 = vpop.f32.mrb[0].mxu0
    %v640 = vadd.f32 0.0, %v639
    %v641 = vpop.f32.mrb[0].mxu0
    %v642 = vadd.f32 0.0, %v641
    %v643 = vpop.f32.mrb[0].mxu0
    %v644 = vadd.f32 0.0, %v643
    %v645 = vpop.f32.mrb[0].mxu0
    %v646 = vadd.f32 0.0, %v645
    %647 = vdwg.mxu0
    %648 = vmatprep.subr.bf16.mxu0 %v544
    %649 = vmatpush1.bf16.msra.mxu0 %v543
    %650 = vmatprep.subr.bf16.mxu0 %v548
    %651 = vmatpush1.bf16.msra.mxu0 %v547
    %652 = vmatprep.subr.bf16.mxu0 %v552
    %653 = vmatpush1.bf16.msra.mxu0 %v551
    %654 = vmatprep.subr.bf16.mxu0 %v556
    %655 = vmatpush1.bf16.msra.mxu0 %v555
    %656 = vmatprep.subr.bf16.mxu0 %v560
    %657 = vmatpush1.bf16.msra.mxu0 %v559
    %658 = vmatprep.subr.bf16.mxu0 %v564
    %659 = vmatpush1.bf16.msra.mxu0 %v563
    %660 = vmatprep.subr.bf16.mxu0 %v568
    %661 = vmatpush1.bf16.msra.mxu0 %v567
    %662 = vmatprep.subr.bf16.mxu0 %v572
    %663 = vmatpush1.bf16.msra.mxu0 %v571
    %664 = vmatprep.subr.bf16.mxu0 %v576
    %665 = vmatpush1.bf16.msra.mxu0 %v575
    %666 = vmatprep.subr.bf16.mxu0 %v580
    %667 = vmatpush1.bf16.msra.mxu0 %v579
    %668 = vmatprep.subr.bf16.mxu0 %v584
    %669 = vmatpush1.bf16.msra.mxu0 %v583
    %670 = vmatprep.subr.bf16.mxu0 %v588
    %671 = vmatpush1.bf16.msra.mxu0 %v587
    %672 = vmatprep.subr.bf16.mxu0 %v592
    %673 = vmatpush1.bf16.msra.mxu0 %v591
    %674 = vmatprep.subr.bf16.mxu0 %v596
    %675 = vmatpush1.bf16.msra.mxu0 %v595
    %676 = vmatprep.subr.bf16.mxu0 %v600
    %677 = vmatpush1.bf16.msra.mxu0 %v599
    %678 = vmatprep.subr.bf16.mxu0 %v604
    %679 = vmatpush1.bf16.msra.mxu0 %v603
    %680 = vmatprep.mubr.bf16.mxu0 %v540
    %681 = vmatmul.mubr.bf16.gmra.mrb[0].mxu0 %v539
    %v682 = vpop.f32.mrb[0].mxu0
    %v683 = vadd.f32 0.0, %v682
    %v684 = vpop.f32.mrb[0].mxu0
    %v685 = vadd.f32 0.0, %v684
    %v686 = vpop.f32.mrb[0].mxu0
    %v687 = vadd.f32 0.0, %v686
    %v688 = vpop.f32.mrb[0].mxu0
    %v689 = vadd.f32 0.0, %v688
    %690 = vdwg.mxu0
    %s691 = scalar_lea.vmem [#allocation12], 4
    %v692 = vld [vmem:[%s691] ss:$8 sm:$0xf]
    %s693 = scalar_lea.vmem [#allocation12], 5
    %v694 = vld [vmem:[%s693] ss:$8 sm:$0xf]
    %v695 = vadd.f32 %v640, %v644
    %v696 = vrot.slane %v695, 4
    %v697 = vadd.f32 %v695, %v696
    %v698 = vrot.slane %v697, 2
    %v699 = vadd.f32 %v697, %v698
    %v700 = vrot.slane %v699, 1
    %v701 = vadd.f32 %v699, %v700
    %v702 = vadd.f32 %v642, %v646
    %v703 = vrot.slane %v702, 4
    %v704 = vadd.f32 %v702, %v703
    %v705 = vrot.slane %v704, 2
    %v706 = vadd.f32 %v704, %v705
    %v707 = vrot.slane %v706, 1
    %v708 = vadd.f32 %v706, %v707
    %v709 = vadd.f32 %v683, %v687
    %v710 = vrot.slane %v709, 4
    %v711 = vadd.f32 %v709, %v710
    %v712 = vrot.slane %v711, 2
    %v713 = vadd.f32 %v711, %v712
    %v714 = vrot.slane %v713, 1
    %v715 = vadd.f32 %v713, %v714
    %v716 = vadd.f32 %v685, %v689
    %v717 = vrot.slane %v716, 4
    %v718 = vadd.f32 %v716, %v717
    %v719 = vrot.slane %v718, 2
    %v720 = vadd.f32 %v718, %v719
    %v721 = vrot.slane %v720, 1
    %v722 = vadd.f32 %v720, %v721
    %v723 = vmul.f32 %v701, %v318
    %v724 = vmul.f32 %v708, %v318
    %v725 = vmul.f32 %v715, %v318
    %v726 = vmul.f32 %v722, %v318
    %v727 = vmul.f32 %v640, %v640
    %v728 = vmul.f32 %v642, %v642
    %v729 = vmul.f32 %v683, %v683
    %v730 = vmul.f32 %v685, %v685
    %v731 = vmul.f32 %v644, %v644
    %v732 = vmul.f32 %v646, %v646
    %v733 = vmul.f32 %v687, %v687
    %v734 = vmul.f32 %v689, %v689
    %v735 = vadd.f32 %v727, %v731
    %v736 = vrot.slane %v735, 4
    %v737 = vadd.f32 %v735, %v736
    %v738 = vrot.slane %v737, 2
    %v739 = vadd.f32 %v737, %v738
    %v740 = vrot.slane %v739, 1
    %v741 = vadd.f32 %v739, %v740
    %v742 = vadd.f32 %v728, %v732
    %v743 = vrot.slane %v742, 4
    %v744 = vadd.f32 %v742, %v743
    %v745 = vrot.slane %v744, 2
    %v746 = vadd.f32 %v744, %v745
    %v747 = vrot.slane %v746, 1
    %v748 = vadd.f32 %v746, %v747
    %v749 = vadd.f32 %v729, %v733
    %v750 = vrot.slane %v749, 4
    %v751 = vadd.f32 %v749, %v750
    %v752 = vrot.slane %v751, 2
    %v753 = vadd.f32 %v751, %v752
    %v754 = vrot.slane %v753, 1
    %v755 = vadd.f32 %v753, %v754
    %v756 = vadd.f32 %v730, %v734
    %v757 = vrot.slane %v756, 4
    %v758 = vadd.f32 %v756, %v757
    %v759 = vrot.slane %v758, 2
    %v760 = vadd.f32 %v758, %v759
    %v761 = vrot.slane %v760, 1
    %v762 = vadd.f32 %v760, %v761
    %v763 = vmul.f32 %v741, %v318
    %v764 = vmul.f32 %v748, %v318
    %v765 = vmul.f32 %v755, %v318
    %v766 = vmul.f32 %v762, %v318
    %v767 = vmul.f32 %v723, %v723
    %v768 = vmul.f32 %v724, %v724
    %v769 = vmul.f32 %v725, %v725
    %v770 = vmul.f32 %v726, %v726
    %v771 = vsub.f32 %v763, %v767
    %v772 = vsub.f32 %v764, %v768
    %v773 = vsub.f32 %v765, %v769
    %v774 = vsub.f32 %v766, %v770
    %v775 = vadd.f32 %v771, 1e-05
    %v776 = vadd.f32 %v772, 1e-05
    %v777 = vadd.f32 %v773, 1e-05
    %v778 = vadd.f32 %v774, 1e-05
    %v779 = vrsqrt.pop %v775
    %v780 = vrsqrt.pop %v776
    %v781 = vrsqrt.pop %v777
    %v782 = vrsqrt.pop %v778
    %v787 = vcombine.low %v779, %v780
    %v788 = vcombine.low %v781, %v782
    %v790 = vunpack.c.l.s4 1966171168
    %v791 = vunpack.c.0.s8 %v790
    %v792 = vlaneseq
    %v793 = vshrl.u32 %v792, 7
    %v794 = vsub.s32 %v791, %v793
    %v795 = vrot.slane %v787, %v794
    %v797 = vunpack.c.l.s4 1966171168
    %v798 = vunpack.c.0.s8 %v797
    %v799 = vlaneseq
    %v800 = vshrl.u32 %v799, 7
    %v801 = vsub.s32 %v798, %v800
    %v802 = vrot.slane %v788, %v801
    %v803 = vcombine.low %v795, %v802
    %v805 = vunpack.c.l.s4 1966171168
    %v806 = vunpack.c.0.s8 %v805
    %v807 = vlaneseq
    %v808 = vshrl.u32 %v807, 7
    %v809 = vsub.s32 %v806, %v808
    %v810 = vrot.slane %v803, %v809
    %v812 = vmul.f32 %v692, %v810
    %v814 = vlaneseq
    %v815 = vshrl.u32 %v814, 7
    %v816 = vsub.s32 0, %v815
    %v817 = vrot.slane %v812, %v816
    %v818 = vlaneseq
    %v819 = vshrl.u32 %v818, 7
    %v820 = vsub.s32 1, %v819
    %v821 = vrot.slane %v812, %v820
    %v822 = vlaneseq
    %v823 = vshrl.u32 %v822, 7
    %v824 = vsub.s32 2, %v823
    %v825 = vrot.slane %v812, %v824
    %v826 = vlaneseq
    %v827 = vshrl.u32 %v826, 7
    %v828 = vsub.s32 3, %v827
    %v829 = vrot.slane %v812, %v828
    %v834 = vmul.f32 %v723, %v817
    %v835 = vmul.f32 %v724, %v821
    %v836 = vmul.f32 %v725, %v825
    %v837 = vmul.f32 %v726, %v829
    %v842 = vcombine.low %v834, %v835
    %v843 = vcombine.low %v836, %v837
    %v845 = vunpack.c.l.s4 1966171168
    %v846 = vunpack.c.0.s8 %v845
    %v847 = vlaneseq
    %v848 = vshrl.u32 %v847, 7
    %v849 = vsub.s32 %v846, %v848
    %v850 = vrot.slane %v842, %v849
    %v852 = vunpack.c.l.s4 1966171168
    %v853 = vunpack.c.0.s8 %v852
    %v854 = vlaneseq
    %v855 = vshrl.u32 %v854, 7
    %v856 = vsub.s32 %v853, %v855
    %v857 = vrot.slane %v843, %v856
    %v858 = vcombine.low %v850, %v857
    %v860 = vunpack.c.l.s4 1966171168
    %v861 = vunpack.c.0.s8 %v860
    %v862 = vlaneseq
    %v863 = vshrl.u32 %v862, 7
    %v864 = vsub.s32 %v861, %v863
    %v865 = vrot.slane %v858, %v864
    %v867 = vsub.f32 %v694, %v865
    %v868 = vmul.f32 %v640, %v817
    %v869 = vmul.f32 %v642, %v821
    %v870 = vmul.f32 %v683, %v825
    %v871 = vmul.f32 %v685, %v829
    %v872 = vmul.f32 %v644, %v817
    %v873 = vmul.f32 %v646, %v821
    %v874 = vmul.f32 %v687, %v825
    %v875 = vmul.f32 %v689, %v829
    %v877 = vlaneseq
    %v878 = vshrl.u32 %v877, 7
    %v879 = vsub.s32 0, %v878
    %v880 = vrot.slane %v867, %v879
    %v881 = vlaneseq
    %v882 = vshrl.u32 %v881, 7
    %v883 = vsub.s32 1, %v882
    %v884 = vrot.slane %v867, %v883
    %v885 = vlaneseq
    %v886 = vshrl.u32 %v885, 7
    %v887 = vsub.s32 2, %v886
    %v888 = vrot.slane %v867, %v887
    %v889 = vlaneseq
    %v890 = vshrl.u32 %v889, 7
    %v891 = vsub.s32 3, %v890
    %v892 = vrot.slane %v867, %v891
    %v897 = vadd.f32 %v868, %v880
    %v898 = vadd.f32 %v869, %v884
    %v899 = vadd.f32 %v870, %v888
    %v900 = vadd.f32 %v871, %v892
    %v901 = vadd.f32 %v872, %v880
    %v902 = vadd.f32 %v873, %v884
    %v903 = vadd.f32 %v874, %v888
    %v904 = vadd.f32 %v875, %v892
    %v905 = vmul.f32 %v897, 0.2
    %v906 = vmul.f32 %v898, 0.2
    %v907 = vmul.f32 %v899, 0.2
    %v908 = vmul.f32 %v900, 0.2
    %v909 = vmul.f32 %v901, 0.2
    %v910 = vmul.f32 %v902, 0.2
    %v911 = vmul.f32 %v903, 0.2
    %v912 = vmul.f32 %v904, 0.2
    %v913 = vmax.f32 %v897, %v905
    %v914 = vmax.f32 %v898, %v906
    %v915 = vmax.f32 %v899, %v907
    %v916 = vmax.f32 %v900, %v908
    %v917 = vmax.f32 %v901, %v909
    %v918 = vmax.f32 %v902, %v910
    %v919 = vmax.f32 %v903, %v911
    %v920 = vmax.f32 %v904, %v912
    %s921 = smul.u32 4, 64
    %s922 = smul.u32 %s921, 8
    %s923 = sshll.u32 %s922, 4
    %924 = dma.done %s131, %s923
    %v925 = vpack.c.bf16 %v917, %v913
    %v926 = vpack.c.bf16 %v918, %v914
    %v927 = vpack.c.bf16 %v919, %v915
    %v928 = vpack.c.bf16 %v920, %v916
    %v929 = vld [vmem:[#allocation4] sm:$0xff]
    %v930 = vld [vmem:[#allocation4 + $0x8] sm:$0xff]
    %v931 = vld [vmem:[#allocation4 + $0x10] sm:$0xff]
    %v932 = vld [vmem:[#allocation4 + $0x18] sm:$0xff]
    %v933 = vld [vmem:[#allocation4 + $0x20] sm:$0xff]
    %v934 = vld [vmem:[#allocation4 + $0x28] sm:$0xff]
    %v935 = vld [vmem:[#allocation4 + $0x30] sm:$0xff]
    %v936 = vld [vmem:[#allocation4 + $0x38] sm:$0xff]
    %v937 = vld [vmem:[#allocation4 + $0x40] sm:$0xff]
    %v938 = vld [vmem:[#allocation4 + $0x48] sm:$0xff]
    %v939 = vld [vmem:[#allocation4 + $0x50] sm:$0xff]
    %v940 = vld [vmem:[#allocation4 + $0x58] sm:$0xff]
    %v941 = vld [vmem:[#allocation4 + $0x60] sm:$0xff]
    %v942 = vld [vmem:[#allocation4 + $0x68] sm:$0xff]
    %v943 = vld [vmem:[#allocation4 + $0x70] sm:$0xff]
    %v944 = vld [vmem:[#allocation4 + $0x78] sm:$0xff]
    %v945 = vld [vmem:[#allocation4 + $0x80] sm:$0xff]
    %v946 = vld [vmem:[#allocation4 + $0x88] sm:$0xff]
    %v947 = vld [vmem:[#allocation4 + $0x90] sm:$0xff]
    %v948 = vld [vmem:[#allocation4 + $0x98] sm:$0xff]
    %v949 = vld [vmem:[#allocation4 + $0xa0] sm:$0xff]
    %v950 = vld [vmem:[#allocation4 + $0xa8] sm:$0xff]
    %v951 = vld [vmem:[#allocation4 + $0xb0] sm:$0xff]
    %v952 = vld [vmem:[#allocation4 + $0xb8] sm:$0xff]
    %v953 = vld [vmem:[#allocation4 + $0xc0] sm:$0xff]
    %v954 = vld [vmem:[#allocation4 + $0xc8] sm:$0xff]
    %v955 = vld [vmem:[#allocation4 + $0xd0] sm:$0xff]
    %v956 = vld [vmem:[#allocation4 + $0xd8] sm:$0xff]
    %v957 = vld [vmem:[#allocation4 + $0xe0] sm:$0xff]
    %v958 = vld [vmem:[#allocation4 + $0xe8] sm:$0xff]
    %v959 = vld [vmem:[#allocation4 + $0xf0] sm:$0xff]
    %v960 = vld [vmem:[#allocation4 + $0xf8] sm:$0xff]
    %v961 = vld [vmem:[#allocation4 + $0x100] sm:$0xff]
    %v962 = vld [vmem:[#allocation4 + $0x108] sm:$0xff]
    %v963 = vld [vmem:[#allocation4 + $0x110] sm:$0xff]
    %v964 = vld [vmem:[#allocation4 + $0x118] sm:$0xff]
    %v965 = vld [vmem:[#allocation4 + $0x120] sm:$0xff]
    %v966 = vld [vmem:[#allocation4 + $0x128] sm:$0xff]
    %v967 = vld [vmem:[#allocation4 + $0x130] sm:$0xff]
    %v968 = vld [vmem:[#allocation4 + $0x138] sm:$0xff]
    %v969 = vld [vmem:[#allocation4 + $0x140] sm:$0xff]
    %v970 = vld [vmem:[#allocation4 + $0x148] sm:$0xff]
    %v971 = vld [vmem:[#allocation4 + $0x150] sm:$0xff]
    %v972 = vld [vmem:[#allocation4 + $0x158] sm:$0xff]
    %v973 = vld [vmem:[#allocation4 + $0x160] sm:$0xff]
    %v974 = vld [vmem:[#allocation4 + $0x168] sm:$0xff]
    %v975 = vld [vmem:[#allocation4 + $0x170] sm:$0xff]
    %v976 = vld [vmem:[#allocation4 + $0x178] sm:$0xff]
    %v977 = vld [vmem:[#allocation4 + $0x180] sm:$0xff]
    %v978 = vld [vmem:[#allocation4 + $0x188] sm:$0xff]
    %v979 = vld [vmem:[#allocation4 + $0x190] sm:$0xff]
    %v980 = vld [vmem:[#allocation4 + $0x198] sm:$0xff]
    %v981 = vld [vmem:[#allocation4 + $0x1a0] sm:$0xff]
    %v982 = vld [vmem:[#allocation4 + $0x1a8] sm:$0xff]
    %v983 = vld [vmem:[#allocation4 + $0x1b0] sm:$0xff]
    %v984 = vld [vmem:[#allocation4 + $0x1b8] sm:$0xff]
    %v985 = vld [vmem:[#allocation4 + $0x1c0] sm:$0xff]
    %v986 = vld [vmem:[#allocation4 + $0x1c8] sm:$0xff]
    %v987 = vld [vmem:[#allocation4 + $0x1d0] sm:$0xff]
    %v988 = vld [vmem:[#allocation4 + $0x1d8] sm:$0xff]
    %v989 = vld [vmem:[#allocation4 + $0x1e0] sm:$0xff]
    %v990 = vld [vmem:[#allocation4 + $0x1e8] sm:$0xff]
    %v991 = vld [vmem:[#allocation4 + $0x1f0] sm:$0xff]
    %v992 = vld [vmem:[#allocation4 + $0x1f8] sm:$0xff]
    %v993 = vld [vmem:[#allocation4 + $0x200] sm:$0xff]
    %v994 = vld [vmem:[#allocation4 + $0x208] sm:$0xff]
    %v995 = vld [vmem:[#allocation4 + $0x210] sm:$0xff]
    %v996 = vld [vmem:[#allocation4 + $0x218] sm:$0xff]
    %v997 = vld [vmem:[#allocation4 + $0x220] sm:$0xff]
    %v998 = vld [vmem:[#allocation4 + $0x228] sm:$0xff]
    %v999 = vld [vmem:[#allocation4 + $0x230] sm:$0xff]
    %v1000 = vld [vmem:[#allocation4 + $0x238] sm:$0xff]
    %v1001 = vld [vmem:[#allocation4 + $0x240] sm:$0xff]
    %v1002 = vld [vmem:[#allocation4 + $0x248] sm:$0xff]
    %v1003 = vld [vmem:[#allocation4 + $0x250] sm:$0xff]
    %v1004 = vld [vmem:[#allocation4 + $0x258] sm:$0xff]
    %v1005 = vld [vmem:[#allocation4 + $0x260] sm:$0xff]
    %v1006 = vld [vmem:[#allocation4 + $0x268] sm:$0xff]
    %v1007 = vld [vmem:[#allocation4 + $0x270] sm:$0xff]
    %v1008 = vld [vmem:[#allocation4 + $0x278] sm:$0xff]
    %v1009 = vld [vmem:[#allocation4 + $0x280] sm:$0xff]
    %v1010 = vld [vmem:[#allocation4 + $0x288] sm:$0xff]
    %v1011 = vld [vmem:[#allocation4 + $0x290] sm:$0xff]
    %v1012 = vld [vmem:[#allocation4 + $0x298] sm:$0xff]
    %v1013 = vld [vmem:[#allocation4 + $0x2a0] sm:$0xff]
    %v1014 = vld [vmem:[#allocation4 + $0x2a8] sm:$0xff]
    %v1015 = vld [vmem:[#allocation4 + $0x2b0] sm:$0xff]
    %v1016 = vld [vmem:[#allocation4 + $0x2b8] sm:$0xff]
    %v1017 = vld [vmem:[#allocation4 + $0x2c0] sm:$0xff]
    %v1018 = vld [vmem:[#allocation4 + $0x2c8] sm:$0xff]
    %v1019 = vld [vmem:[#allocation4 + $0x2d0] sm:$0xff]
    %v1020 = vld [vmem:[#allocation4 + $0x2d8] sm:$0xff]
    %v1021 = vld [vmem:[#allocation4 + $0x2e0] sm:$0xff]
    %v1022 = vld [vmem:[#allocation4 + $0x2e8] sm:$0xff]
    %v1023 = vld [vmem:[#allocation4 + $0x2f0] sm:$0xff]
    %v1024 = vld [vmem:[#allocation4 + $0x2f8] sm:$0xff]
    %v1025 = vld [vmem:[#allocation4 + $0x300] sm:$0xff]
    %v1026 = vld [vmem:[#allocation4 + $0x308] sm:$0xff]
    %v1027 = vld [vmem:[#allocation4 + $0x310] sm:$0xff]
    %v1028 = vld [vmem:[#allocation4 + $0x318] sm:$0xff]
    %v1029 = vld [vmem:[#allocation4 + $0x320] sm:$0xff]
    %v1030 = vld [vmem:[#allocation4 + $0x328] sm:$0xff]
    %v1031 = vld [vmem:[#allocation4 + $0x330] sm:$0xff]
    %v1032 = vld [vmem:[#allocation4 + $0x338] sm:$0xff]
    %v1033 = vld [vmem:[#allocation4 + $0x340] sm:$0xff]
    %v1034 = vld [vmem:[#allocation4 + $0x348] sm:$0xff]
    %v1035 = vld [vmem:[#allocation4 + $0x350] sm:$0xff]
    %v1036 = vld [vmem:[#allocation4 + $0x358] sm:$0xff]
    %v1037 = vld [vmem:[#allocation4 + $0x360] sm:$0xff]
    %v1038 = vld [vmem:[#allocation4 + $0x368] sm:$0xff]
    %v1039 = vld [vmem:[#allocation4 + $0x370] sm:$0xff]
    %v1040 = vld [vmem:[#allocation4 + $0x378] sm:$0xff]
    %v1041 = vld [vmem:[#allocation4 + $0x380] sm:$0xff]
    %v1042 = vld [vmem:[#allocation4 + $0x388] sm:$0xff]
    %v1043 = vld [vmem:[#allocation4 + $0x390] sm:$0xff]
    %v1044 = vld [vmem:[#allocation4 + $0x398] sm:$0xff]
    %v1045 = vld [vmem:[#allocation4 + $0x3a0] sm:$0xff]
    %v1046 = vld [vmem:[#allocation4 + $0x3a8] sm:$0xff]
    %v1047 = vld [vmem:[#allocation4 + $0x3b0] sm:$0xff]
    %v1048 = vld [vmem:[#allocation4 + $0x3b8] sm:$0xff]
    %v1049 = vld [vmem:[#allocation4 + $0x3c0] sm:$0xff]
    %v1050 = vld [vmem:[#allocation4 + $0x3c8] sm:$0xff]
    %v1051 = vld [vmem:[#allocation4 + $0x3d0] sm:$0xff]
    %v1052 = vld [vmem:[#allocation4 + $0x3d8] sm:$0xff]
    %v1053 = vld [vmem:[#allocation4 + $0x3e0] sm:$0xff]
    %v1054 = vld [vmem:[#allocation4 + $0x3e8] sm:$0xff]
    %v1055 = vld [vmem:[#allocation4 + $0x3f0] sm:$0xff]
    %v1056 = vld [vmem:[#allocation4 + $0x3f8] sm:$0xff]
    %v1057 = vld [vmem:[#allocation4 + $0x400] sm:$0xff]
    %v1058 = vld [vmem:[#allocation4 + $0x408] sm:$0xff]
    %v1059 = vld [vmem:[#allocation4 + $0x410] sm:$0xff]
    %v1060 = vld [vmem:[#allocation4 + $0x418] sm:$0xff]
    %v1061 = vld [vmem:[#allocation4 + $0x420] sm:$0xff]
    %v1062 = vld [vmem:[#allocation4 + $0x428] sm:$0xff]
    %v1063 = vld [vmem:[#allocation4 + $0x430] sm:$0xff]
    %v1064 = vld [vmem:[#allocation4 + $0x438] sm:$0xff]
    %v1065 = vld [vmem:[#allocation4 + $0x440] sm:$0xff]
    %v1066 = vld [vmem:[#allocation4 + $0x448] sm:$0xff]
    %v1067 = vld [vmem:[#allocation4 + $0x450] sm:$0xff]
    %v1068 = vld [vmem:[#allocation4 + $0x458] sm:$0xff]
    %v1069 = vld [vmem:[#allocation4 + $0x460] sm:$0xff]
    %v1070 = vld [vmem:[#allocation4 + $0x468] sm:$0xff]
    %v1071 = vld [vmem:[#allocation4 + $0x470] sm:$0xff]
    %v1072 = vld [vmem:[#allocation4 + $0x478] sm:$0xff]
    %v1073 = vld [vmem:[#allocation4 + $0x480] sm:$0xff]
    %v1074 = vld [vmem:[#allocation4 + $0x488] sm:$0xff]
    %v1075 = vld [vmem:[#allocation4 + $0x490] sm:$0xff]
    %v1076 = vld [vmem:[#allocation4 + $0x498] sm:$0xff]
    %v1077 = vld [vmem:[#allocation4 + $0x4a0] sm:$0xff]
    %v1078 = vld [vmem:[#allocation4 + $0x4a8] sm:$0xff]
    %v1079 = vld [vmem:[#allocation4 + $0x4b0] sm:$0xff]
    %v1080 = vld [vmem:[#allocation4 + $0x4b8] sm:$0xff]
    %v1081 = vld [vmem:[#allocation4 + $0x4c0] sm:$0xff]
    %v1082 = vld [vmem:[#allocation4 + $0x4c8] sm:$0xff]
    %v1083 = vld [vmem:[#allocation4 + $0x4d0] sm:$0xff]
    %v1084 = vld [vmem:[#allocation4 + $0x4d8] sm:$0xff]
    %v1085 = vld [vmem:[#allocation4 + $0x4e0] sm:$0xff]
    %v1086 = vld [vmem:[#allocation4 + $0x4e8] sm:$0xff]
    %v1087 = vld [vmem:[#allocation4 + $0x4f0] sm:$0xff]
    %v1088 = vld [vmem:[#allocation4 + $0x4f8] sm:$0xff]
    %v1089 = vld [vmem:[#allocation4 + $0x500] sm:$0xff]
    %v1090 = vld [vmem:[#allocation4 + $0x508] sm:$0xff]
    %v1091 = vld [vmem:[#allocation4 + $0x510] sm:$0xff]
    %v1092 = vld [vmem:[#allocation4 + $0x518] sm:$0xff]
    %v1093 = vld [vmem:[#allocation4 + $0x520] sm:$0xff]
    %v1094 = vld [vmem:[#allocation4 + $0x528] sm:$0xff]
    %v1095 = vld [vmem:[#allocation4 + $0x530] sm:$0xff]
    %v1096 = vld [vmem:[#allocation4 + $0x538] sm:$0xff]
    %v1097 = vld [vmem:[#allocation4 + $0x540] sm:$0xff]
    %v1098 = vld [vmem:[#allocation4 + $0x548] sm:$0xff]
    %v1099 = vld [vmem:[#allocation4 + $0x550] sm:$0xff]
    %v1100 = vld [vmem:[#allocation4 + $0x558] sm:$0xff]
    %v1101 = vld [vmem:[#allocation4 + $0x560] sm:$0xff]
    %v1102 = vld [vmem:[#allocation4 + $0x568] sm:$0xff]
    %v1103 = vld [vmem:[#allocation4 + $0x570] sm:$0xff]
    %v1104 = vld [vmem:[#allocation4 + $0x578] sm:$0xff]
    %v1105 = vld [vmem:[#allocation4 + $0x580] sm:$0xff]
    %v1106 = vld [vmem:[#allocation4 + $0x588] sm:$0xff]
    %v1107 = vld [vmem:[#allocation4 + $0x590] sm:$0xff]
    %v1108 = vld [vmem:[#allocation4 + $0x598] sm:$0xff]
    %v1109 = vld [vmem:[#allocation4 + $0x5a0] sm:$0xff]
    %v1110 = vld [vmem:[#allocation4 + $0x5a8] sm:$0xff]
    %v1111 = vld [vmem:[#allocation4 + $0x5b0] sm:$0xff]
    %v1112 = vld [vmem:[#allocation4 + $0x5b8] sm:$0xff]
    %v1113 = vld [vmem:[#allocation4 + $0x5c0] sm:$0xff]
    %v1114 = vld [vmem:[#allocation4 + $0x5c8] sm:$0xff]
    %v1115 = vld [vmem:[#allocation4 + $0x5d0] sm:$0xff]
    %v1116 = vld [vmem:[#allocation4 + $0x5d8] sm:$0xff]
    %v1117 = vld [vmem:[#allocation4 + $0x5e0] sm:$0xff]
    %v1118 = vld [vmem:[#allocation4 + $0x5e8] sm:$0xff]
    %v1119 = vld [vmem:[#allocation4 + $0x5f0] sm:$0xff]
    %v1120 = vld [vmem:[#allocation4 + $0x5f8] sm:$0xff]
    %v1121 = vld [vmem:[#allocation4 + $0x600] sm:$0xff]
    %v1122 = vld [vmem:[#allocation4 + $0x608] sm:$0xff]
    %v1123 = vld [vmem:[#allocation4 + $0x610] sm:$0xff]
    %v1124 = vld [vmem:[#allocation4 + $0x618] sm:$0xff]
    %v1125 = vld [vmem:[#allocation4 + $0x620] sm:$0xff]
    %v1126 = vld [vmem:[#allocation4 + $0x628] sm:$0xff]
    %v1127 = vld [vmem:[#allocation4 + $0x630] sm:$0xff]
    %v1128 = vld [vmem:[#allocation4 + $0x638] sm:$0xff]
    %v1129 = vld [vmem:[#allocation4 + $0x640] sm:$0xff]
    %v1130 = vld [vmem:[#allocation4 + $0x648] sm:$0xff]
    %v1131 = vld [vmem:[#allocation4 + $0x650] sm:$0xff]
    %v1132 = vld [vmem:[#allocation4 + $0x658] sm:$0xff]
    %v1133 = vld [vmem:[#allocation4 + $0x660] sm:$0xff]
    %v1134 = vld [vmem:[#allocation4 + $0x668] sm:$0xff]
    %v1135 = vld [vmem:[#allocation4 + $0x670] sm:$0xff]
    %v1136 = vld [vmem:[#allocation4 + $0x678] sm:$0xff]
    %v1137 = vld [vmem:[#allocation4 + $0x680] sm:$0xff]
    %v1138 = vld [vmem:[#allocation4 + $0x688] sm:$0xff]
    %v1139 = vld [vmem:[#allocation4 + $0x690] sm:$0xff]
    %v1140 = vld [vmem:[#allocation4 + $0x698] sm:$0xff]
    %v1141 = vld [vmem:[#allocation4 + $0x6a0] sm:$0xff]
    %v1142 = vld [vmem:[#allocation4 + $0x6a8] sm:$0xff]
    %v1143 = vld [vmem:[#allocation4 + $0x6b0] sm:$0xff]
    %v1144 = vld [vmem:[#allocation4 + $0x6b8] sm:$0xff]
    %v1145 = vld [vmem:[#allocation4 + $0x6c0] sm:$0xff]
    %v1146 = vld [vmem:[#allocation4 + $0x6c8] sm:$0xff]
    %v1147 = vld [vmem:[#allocation4 + $0x6d0] sm:$0xff]
    %v1148 = vld [vmem:[#allocation4 + $0x6d8] sm:$0xff]
    %v1149 = vld [vmem:[#allocation4 + $0x6e0] sm:$0xff]
    %v1150 = vld [vmem:[#allocation4 + $0x6e8] sm:$0xff]
    %v1151 = vld [vmem:[#allocation4 + $0x6f0] sm:$0xff]
    %v1152 = vld [vmem:[#allocation4 + $0x6f8] sm:$0xff]
    %v1153 = vld [vmem:[#allocation4 + $0x700] sm:$0xff]
    %v1154 = vld [vmem:[#allocation4 + $0x708] sm:$0xff]
    %v1155 = vld [vmem:[#allocation4 + $0x710] sm:$0xff]
    %v1156 = vld [vmem:[#allocation4 + $0x718] sm:$0xff]
    %v1157 = vld [vmem:[#allocation4 + $0x720] sm:$0xff]
    %v1158 = vld [vmem:[#allocation4 + $0x728] sm:$0xff]
    %v1159 = vld [vmem:[#allocation4 + $0x730] sm:$0xff]
    %v1160 = vld [vmem:[#allocation4 + $0x738] sm:$0xff]
    %v1161 = vld [vmem:[#allocation4 + $0x740] sm:$0xff]
    %v1162 = vld [vmem:[#allocation4 + $0x748] sm:$0xff]
    %v1163 = vld [vmem:[#allocation4 + $0x750] sm:$0xff]
    %v1164 = vld [vmem:[#allocation4 + $0x758] sm:$0xff]
    %v1165 = vld [vmem:[#allocation4 + $0x760] sm:$0xff]
    %v1166 = vld [vmem:[#allocation4 + $0x768] sm:$0xff]
    %v1167 = vld [vmem:[#allocation4 + $0x770] sm:$0xff]
    %v1168 = vld [vmem:[#allocation4 + $0x778] sm:$0xff]
    %v1169 = vld [vmem:[#allocation4 + $0x780] sm:$0xff]
    %v1170 = vld [vmem:[#allocation4 + $0x788] sm:$0xff]
    %v1171 = vld [vmem:[#allocation4 + $0x790] sm:$0xff]
    %v1172 = vld [vmem:[#allocation4 + $0x798] sm:$0xff]
    %v1173 = vld [vmem:[#allocation4 + $0x7a0] sm:$0xff]
    %v1174 = vld [vmem:[#allocation4 + $0x7a8] sm:$0xff]
    %v1175 = vld [vmem:[#allocation4 + $0x7b0] sm:$0xff]
    %v1176 = vld [vmem:[#allocation4 + $0x7b8] sm:$0xff]
    %v1177 = vld [vmem:[#allocation4 + $0x7c0] sm:$0xff]
    %v1178 = vld [vmem:[#allocation4 + $0x7c8] sm:$0xff]
    %v1179 = vld [vmem:[#allocation4 + $0x7d0] sm:$0xff]
    %v1180 = vld [vmem:[#allocation4 + $0x7d8] sm:$0xff]
    %v1181 = vld [vmem:[#allocation4 + $0x7e0] sm:$0xff]
    %v1182 = vld [vmem:[#allocation4 + $0x7e8] sm:$0xff]
    %v1183 = vld [vmem:[#allocation4 + $0x7f0] sm:$0xff]
    %v1184 = vld [vmem:[#allocation4 + $0x7f8] sm:$0xff]
    %1185 = vmatprep.subr.bf16.mxu0 %v930
    %1186 = vmatpush1.bf16.msra.mxu0 %v929
    %1187 = vmatprep.subr.bf16.mxu0 %v938
    %1188 = vmatpush1.bf16.msra.mxu0 %v937
    %1189 = vmatprep.subr.bf16.mxu0 %v946
    %1190 = vmatpush1.bf16.msra.mxu0 %v945
    %1191 = vmatprep.subr.bf16.mxu0 %v954
    %1192 = vmatpush1.bf16.msra.mxu0 %v953
    %1193 = vmatprep.subr.bf16.mxu0 %v962
    %1194 = vmatpush1.bf16.msra.mxu0 %v961
    %1195 = vmatprep.subr.bf16.mxu0 %v970
    %1196 = vmatpush1.bf16.msra.mxu0 %v969
    %1197 = vmatprep.subr.bf16.mxu0 %v978
    %1198 = vmatpush1.bf16.msra.mxu0 %v977
    %1199 = vmatprep.subr.bf16.mxu0 %v986
    %1200 = vmatpush1.bf16.msra.mxu0 %v985
    %1201 = vmatprep.subr.bf16.mxu0 %v994
    %1202 = vmatpush1.bf16.msra.mxu0 %v993
    %1203 = vmatprep.subr.bf16.mxu0 %v1002
    %1204 = vmatpush1.bf16.msra.mxu0 %v1001
    %1205 = vmatprep.subr.bf16.mxu0 %v1010
    %1206 = vmatpush1.bf16.msra.mxu0 %v1009
    %1207 = vmatprep.subr.bf16.mxu0 %v1018
    %1208 = vmatpush1.bf16.msra.mxu0 %v1017
    %1209 = vmatprep.subr.bf16.mxu0 %v1026
    %1210 = vmatpush1.bf16.msra.mxu0 %v1025
    %1211 = vmatprep.subr.bf16.mxu0 %v1034
    %1212 = vmatpush1.bf16.msra.mxu0 %v1033
    %1213 = vmatprep.subr.bf16.mxu0 %v1042
    %1214 = vmatpush1.bf16.msra.mxu0 %v1041
    %1215 = vmatprep.subr.bf16.mxu0 %v1050
    %1216 = vmatpush1.bf16.msra.mxu0 %v1049
    %1217 = vmatprep.mubr.bf16.mxu0 %v926
    %1218 = vmatmul.mubr.bf16.gmra.mrb[0].mxu0 %v925
    %v1219 = vpop.f32.mrb[0].mxu0
    %v1220 = vadd.f32 0.0, %v1219
    %v1221 = vpop.f32.mrb[0].mxu0
    %v1222 = vadd.f32 0.0, %v1221
    %v1223 = vpop.f32.mrb[0].mxu0
    %v1224 = vadd.f32 0.0, %v1223
    %v1225 = vpop.f32.mrb[0].mxu0
    %v1226 = vadd.f32 0.0, %v1225
    %1227 = vdwg.mxu0
    %1228 = vmatprep.subr.bf16.mxu0 %v1058
    %1229 = vmatpush1.bf16.msra.mxu0 %v1057
    %1230 = vmatprep.subr.bf16.mxu0 %v1066
    %1231 = vmatpush1.bf16.msra.mxu0 %v1065
    %1232 = vmatprep.subr.bf16.mxu0 %v1074
    %1233 = vmatpush1.bf16.msra.mxu0 %v1073
    %1234 = vmatprep.subr.bf16.mxu0 %v1082
    %1235 = vmatpush1.bf16.msra.mxu0 %v1081
    %1236 = vmatprep.subr.bf16.mxu0 %v1090
    %1237 = vmatpush1.bf16.msra.mxu0 %v1089
    %1238 = vmatprep.subr.bf16.mxu0 %v1098
    %1239 = vmatpush1.bf16.msra.mxu0 %v1097
    %1240 = vmatprep.subr.bf16.mxu0 %v1106
    %1241 = vmatpush1.bf16.msra.mxu0 %v1105
    %1242 = vmatprep.subr.bf16.mxu0 %v1114
    %1243 = vmatpush1.bf16.msra.mxu0 %v1113
    %1244 = vmatprep.subr.bf16.mxu0 %v1122
    %1245 = vmatpush1.bf16.msra.mxu0 %v1121
    %1246 = vmatprep.subr.bf16.mxu0 %v1130
    %1247 = vmatpush1.bf16.msra.mxu0 %v1129
    %1248 = vmatprep.subr.bf16.mxu0 %v1138
    %1249 = vmatpush1.bf16.msra.mxu0 %v1137
    %1250 = vmatprep.subr.bf16.mxu0 %v1146
    %1251 = vmatpush1.bf16.msra.mxu0 %v1145
    %1252 = vmatprep.subr.bf16.mxu0 %v1154
    %1253 = vmatpush1.bf16.msra.mxu0 %v1153
    %1254 = vmatprep.subr.bf16.mxu0 %v1162
    %1255 = vmatpush1.bf16.msra.mxu0 %v1161
    %1256 = vmatprep.subr.bf16.mxu0 %v1170
    %1257 = vmatpush1.bf16.msra.mxu0 %v1169
    %1258 = vmatprep.subr.bf16.mxu0 %v1178
    %1259 = vmatpush1.bf16.msra.mxu0 %v1177
    %1260 = vmatprep.mubr.bf16.mxu0 %v928
    %1261 = vmatmul.mubr.bf16.gmra.mrb[0].mxu0 %v927
    %v1262 = vpop.f32.mrb[0].mxu0
    %v1263 = vadd.f32 %v1220, %v1262
    %v1264 = vpop.f32.mrb[0].mxu0
    %v1265 = vadd.f32 %v1222, %v1264
    %v1266 = vpop.f32.mrb[0].mxu0
    %v1267 = vadd.f32 %v1224, %v1266
    %v1268 = vpop.f32.mrb[0].mxu0
    %v1269 = vadd.f32 %v1226, %v1268
    %1270 = vdwg.mxu0
    %1271 = vmatprep.subr.bf16.mxu0 %v932
    %1272 = vmatpush1.bf16.msra.mxu0 %v931
    %1273 = vmatprep.subr.bf16.mxu0 %v940
    %1274 = vmatpush1.bf16.msra.mxu0 %v939
    %1275 = vmatprep.subr.bf16.mxu0 %v948
    %1276 = vmatpush1.bf16.msra.mxu0 %v947
    %1277 = vmatprep.subr.bf16.mxu0 %v956
    %1278 = vmatpush1.bf16.msra.mxu0 %v955
    %1279 = vmatprep.subr.bf16.mxu0 %v964
    %1280 = vmatpush1.bf16.msra.mxu0 %v963
    %1281 = vmatprep.subr.bf16.mxu0 %v972
    %1282 = vmatpush1.bf16.msra.mxu0 %v971
    %1283 = vmatprep.subr.bf16.mxu0 %v980
    %1284 = vmatpush1.bf16.msra.mxu0 %v979
    %1285 = vmatprep.subr.bf16.mxu0 %v988
    %1286 = vmatpush1.bf16.msra.mxu0 %v987
    %1287 = vmatprep.subr.bf16.mxu0 %v996
    %1288 = vmatpush1.bf16.msra.mxu0 %v995
    %1289 = vmatprep.subr.bf16.mxu0 %v1004
    %1290 = vmatpush1.bf16.msra.mxu0 %v1003
    %1291 = vmatprep.subr.bf16.mxu0 %v1012
    %1292 = vmatpush1.bf16.msra.mxu0 %v1011
    %1293 = vmatprep.subr.bf16.mxu0 %v1020
    %1294 = vmatpush1.bf16.msra.mxu0 %v1019
    %1295 = vmatprep.subr.bf16.mxu0 %v1028
    %1296 = vmatpush1.bf16.msra.mxu0 %v1027
    %1297 = vmatprep.subr.bf16.mxu0 %v1036
    %1298 = vmatpush1.bf16.msra.mxu0 %v1035
    %1299 = vmatprep.subr.bf16.mxu0 %v1044
    %1300 = vmatpush1.bf16.msra.mxu0 %v1043
    %1301 = vmatprep.subr.bf16.mxu0 %v1052
    %1302 = vmatpush1.bf16.msra.mxu0 %v1051
    %1303 = vmatprep.mubr.bf16.mxu0 %v926
    %1304 = vmatmul.mubr.bf16.gmra.mrb[0].mxu0 %v925
    %v1305 = vpop.f32.mrb[0].mxu0
    %v1306 = vadd.f32 0.0, %v1305
    %v1307 = vpop.f32.mrb[0].mxu0
    %v1308 = vadd.f32 0.0, %v1307
    %v1309 = vpop.f32.mrb[0].mxu0
    %v1310 = vadd.f32 0.0, %v1309
    %v1311 = vpop.f32.mrb[0].mxu0
    %v1312 = vadd.f32 0.0, %v1311
    %1313 = vdwg.mxu0
    %1314 = vmatprep.subr.bf16.mxu0 %v1060
    %1315 = vmatpush1.bf16.msra.mxu0 %v1059
    %1316 = vmatprep.subr.bf16.mxu0 %v1068
    %1317 = vmatpush1.bf16.msra.mxu0 %v1067
    %1318 = vmatprep.subr.bf16.mxu0 %v1076
    %1319 = vmatpush1.bf16.msra.mxu0 %v1075
    %1320 = vmatprep.subr.bf16.mxu0 %v1084
    %1321 = vmatpush1.bf16.msra.mxu0 %v1083
    %1322 = vmatprep.subr.bf16.mxu0 %v1092
    %1323 = vmatpush1.bf16.msra.mxu0 %v1091
    %1324 = vmatprep.subr.bf16.mxu0 %v1100
    %1325 = vmatpush1.bf16.msra.mxu0 %v1099
    %1326 = vmatprep.subr.bf16.mxu0 %v1108
    %1327 = vmatpush1.bf16.msra.mxu0 %v1107
    %1328 = vmatprep.subr.bf16.mxu0 %v1116
    %1329 = vmatpush1.bf16.msra.mxu0 %v1115
    %1330 = vmatprep.subr.bf16.mxu0 %v1124
    %1331 = vmatpush1.bf16.msra.mxu0 %v1123
    %1332 = vmatprep.subr.bf16.mxu0 %v1132
    %1333 = vmatpush1.bf16.msra.mxu0 %v1131
    %1334 = vmatprep.subr.bf16.mxu0 %v1140
    %1335 = vmatpush1.bf16.msra.mxu0 %v1139
    %1336 = vmatprep.subr.bf16.mxu0 %v1148
    %1337 = vmatpush1.bf16.msra.mxu0 %v1147
    %1338 = vmatprep.subr.bf16.mxu0 %v1156
    %1339 = vmatpush1.bf16.msra.mxu0 %v1155
    %1340 = vmatprep.subr.bf16.mxu0 %v1164
    %1341 = vmatpush1.bf16.msra.mxu0 %v1163
    %1342 = vmatprep.subr.bf16.mxu0 %v1172
    %1343 = vmatpush1.bf16.msra.mxu0 %v1171
    %1344 = vmatprep.subr.bf16.mxu0 %v1180
    %1345 = vmatpush1.bf16.msra.mxu0 %v1179
    %1346 = vmatprep.mubr.bf16.mxu0 %v928
    %1347 = vmatmul.mubr.bf16.gmra.mrb[0].mxu0 %v927
    %v1348 = vpop.f32.mrb[0].mxu0
    %v1349 = vadd.f32 %v1306, %v1348
    %v1350 = vpop.f32.mrb[0].mxu0
    %v1351 = vadd.f32 %v1308, %v1350
    %v1352 = vpop.f32.mrb[0].mxu0
    %v1353 = vadd.f32 %v1310, %v1352
    %v1354 = vpop.f32.mrb[0].mxu0
    %v1355 = vadd.f32 %v1312, %v1354
    %1356 = vdwg.mxu0
    %1357 = vmatprep.subr.bf16.mxu0 %v934
    %1358 = vmatpush1.bf16.msra.mxu0 %v933
    %1359 = vmatprep.subr.bf16.mxu0 %v942
    %1360 = vmatpush1.bf16.msra.mxu0 %v941
    %1361 = vmatprep.subr.bf16.mxu0 %v950
    %1362 = vmatpush1.bf16.msra.mxu0 %v949
    %1363 = vmatprep.subr.bf16.mxu0 %v958
    %1364 = vmatpush1.bf16.msra.mxu0 %v957
    %1365 = vmatprep.subr.bf16.mxu0 %v966
    %1366 = vmatpush1.bf16.msra.mxu0 %v965
    %1367 = vmatprep.subr.bf16.mxu0 %v974
    %1368 = vmatpush1.bf16.msra.mxu0 %v973
    %1369 = vmatprep.subr.bf16.mxu0 %v982
    %1370 = vmatpush1.bf16.msra.mxu0 %v981
    %1371 = vmatprep.subr.bf16.mxu0 %v990
    %1372 = vmatpush1.bf16.msra.mxu0 %v989
    %1373 = vmatprep.subr.bf16.mxu0 %v998
    %1374 = vmatpush1.bf16.msra.mxu0 %v997
    %1375 = vmatprep.subr.bf16.mxu0 %v1006
    %1376 = vmatpush1.bf16.msra.mxu0 %v1005
    %1377 = vmatprep.subr.bf16.mxu0 %v1014
    %1378 = vmatpush1.bf16.msra.mxu0 %v1013
    %1379 = vmatprep.subr.bf16.mxu0 %v1022
    %1380 = vmatpush1.bf16.msra.mxu0 %v1021
    %1381 = vmatprep.subr.bf16.mxu0 %v1030
    %1382 = vmatpush1.bf16.msra.mxu0 %v1029
    %1383 = vmatprep.subr.bf16.mxu0 %v1038
    %1384 = vmatpush1.bf16.msra.mxu0 %v1037
    %1385 = vmatprep.subr.bf16.mxu0 %v1046
    %1386 = vmatpush1.bf16.msra.mxu0 %v1045
    %1387 = vmatprep.subr.bf16.mxu0 %v1054
    %1388 = vmatpush1.bf16.msra.mxu0 %v1053
    %1389 = vmatprep.mubr.bf16.mxu0 %v926
    %1390 = vmatmul.mubr.bf16.gmra.mrb[0].mxu0 %v925
    %v1391 = vpop.f32.mrb[0].mxu0
    %v1392 = vadd.f32 0.0, %v1391
    %v1393 = vpop.f32.mrb[0].mxu0
    %v1394 = vadd.f32 0.0, %v1393
    %v1395 = vpop.f32.mrb[0].mxu0
    %v1396 = vadd.f32 0.0, %v1395
    %v1397 = vpop.f32.mrb[0].mxu0
    %v1398 = vadd.f32 0.0, %v1397
    %1399 = vdwg.mxu0
    %1400 = vmatprep.subr.bf16.mxu0 %v1062
    %1401 = vmatpush1.bf16.msra.mxu0 %v1061
    %1402 = vmatprep.subr.bf16.mxu0 %v1070
    %1403 = vmatpush1.bf16.msra.mxu0 %v1069
    %1404 = vmatprep.subr.bf16.mxu0 %v1078
    %1405 = vmatpush1.bf16.msra.mxu0 %v1077
    %1406 = vmatprep.subr.bf16.mxu0 %v1086
    %1407 = vmatpush1.bf16.msra.mxu0 %v1085
    %1408 = vmatprep.subr.bf16.mxu0 %v1094
    %1409 = vmatpush1.bf16.msra.mxu0 %v1093
    %1410 = vmatprep.subr.bf16.mxu0 %v1102
    %1411 = vmatpush1.bf16.msra.mxu0 %v1101
    %1412 = vmatprep.subr.bf16.mxu0 %v1110
    %1413 = vmatpush1.bf16.msra.mxu0 %v1109
    %1414 = vmatprep.subr.bf16.mxu0 %v1118
    %1415 = vmatpush1.bf16.msra.mxu0 %v1117
    %1416 = vmatprep.subr.bf16.mxu0 %v1126
    %1417 = vmatpush1.bf16.msra.mxu0 %v1125
    %1418 = vmatprep.subr.bf16.mxu0 %v1134
    %1419 = vmatpush1.bf16.msra.mxu0 %v1133
    %1420 = vmatprep.subr.bf16.mxu0 %v1142
    %1421 = vmatpush1.bf16.msra.mxu0 %v1141
    %1422 = vmatprep.subr.bf16.mxu0 %v1150
    %1423 = vmatpush1.bf16.msra.mxu0 %v1149
    %1424 = vmatprep.subr.bf16.mxu0 %v1158
    %1425 = vmatpush1.bf16.msra.mxu0 %v1157
    %1426 = vmatprep.subr.bf16.mxu0 %v1166
    %1427 = vmatpush1.bf16.msra.mxu0 %v1165
    %1428 = vmatprep.subr.bf16.mxu0 %v1174
    %1429 = vmatpush1.bf16.msra.mxu0 %v1173
    %1430 = vmatprep.subr.bf16.mxu0 %v1182
    %1431 = vmatpush1.bf16.msra.mxu0 %v1181
    %1432 = vmatprep.mubr.bf16.mxu0 %v928
    %1433 = vmatmul.mubr.bf16.gmra.mrb[0].mxu0 %v927
    %v1434 = vpop.f32.mrb[0].mxu0
    %v1435 = vadd.f32 %v1392, %v1434
    %v1436 = vpop.f32.mrb[0].mxu0
    %v1437 = vadd.f32 %v1394, %v1436
    %v1438 = vpop.f32.mrb[0].mxu0
    %v1439 = vadd.f32 %v1396, %v1438
    %v1440 = vpop.f32.mrb[0].mxu0
    %v1441 = vadd.f32 %v1398, %v1440
    %1442 = vdwg.mxu0
    %1443 = vmatprep.subr.bf16.mxu0 %v936
    %1444 = vmatpush1.bf16.msra.mxu0 %v935
    %1445 = vmatprep.subr.bf16.mxu0 %v944
    %1446 = vmatpush1.bf16.msra.mxu0 %v943
    %1447 = vmatprep.subr.bf16.mxu0 %v952
    %1448 = vmatpush1.bf16.msra.mxu0 %v951
    %1449 = vmatprep.subr.bf16.mxu0 %v960
    %1450 = vmatpush1.bf16.msra.mxu0 %v959
    %1451 = vmatprep.subr.bf16.mxu0 %v968
    %1452 = vmatpush1.bf16.msra.mxu0 %v967
    %1453 = vmatprep.subr.bf16.mxu0 %v976
    %1454 = vmatpush1.bf16.msra.mxu0 %v975
    %1455 = vmatprep.subr.bf16.mxu0 %v984
    %1456 = vmatpush1.bf16.msra.mxu0 %v983
    %1457 = vmatprep.subr.bf16.mxu0 %v992
    %1458 = vmatpush1.bf16.msra.mxu0 %v991
    %1459 = vmatprep.subr.bf16.mxu0 %v1000
    %1460 = vmatpush1.bf16.msra.mxu0 %v999
    %1461 = vmatprep.subr.bf16.mxu0 %v1008
    %1462 = vmatpush1.bf16.msra.mxu0 %v1007
    %1463 = vmatprep.subr.bf16.mxu0 %v1016
    %1464 = vmatpush1.bf16.msra.mxu0 %v1015
    %1465 = vmatprep.subr.bf16.mxu0 %v1024
    %1466 = vmatpush1.bf16.msra.mxu0 %v1023
    %1467 = vmatprep.subr.bf16.mxu0 %v1032
    %1468 = vmatpush1.bf16.msra.mxu0 %v1031
    %1469 = vmatprep.subr.bf16.mxu0 %v1040
    %1470 = vmatpush1.bf16.msra.mxu0 %v1039
    %1471 = vmatprep.subr.bf16.mxu0 %v1048
    %1472 = vmatpush1.bf16.msra.mxu0 %v1047
    %1473 = vmatprep.subr.bf16.mxu0 %v1056
    %1474 = vmatpush1.bf16.msra.mxu0 %v1055
    %1475 = vmatprep.mubr.bf16.mxu0 %v926
    %1476 = vmatmul.mubr.bf16.gmra.mrb[0].mxu0 %v925
    %v1477 = vpop.f32.mrb[0].mxu0
    %v1478 = vadd.f32 0.0, %v1477
    %v1479 = vpop.f32.mrb[0].mxu0
    %v1480 = vadd.f32 0.0, %v1479
    %v1481 = vpop.f32.mrb[0].mxu0
    %v1482 = vadd.f32 0.0, %v1481
    %v1483 = vpop.f32.mrb[0].mxu0
    %v1484 = vadd.f32 0.0, %v1483
    %1485 = vdwg.mxu0
    %1486 = vmatprep.subr.bf16.mxu0 %v1064
    %1487 = vmatpush1.bf16.msra.mxu0 %v1063
    %1488 = vmatprep.subr.bf16.mxu0 %v1072
    %1489 = vmatpush1.bf16.msra.mxu0 %v1071
    %1490 = vmatprep.subr.bf16.mxu0 %v1080
    %1491 = vmatpush1.bf16.msra.mxu0 %v1079
    %1492 = vmatprep.subr.bf16.mxu0 %v1088
    %1493 = vmatpush1.bf16.msra.mxu0 %v1087
    %1494 = vmatprep.subr.bf16.mxu0 %v1096
    %1495 = vmatpush1.bf16.msra.mxu0 %v1095
    %1496 = vmatprep.subr.bf16.mxu0 %v1104
    %1497 = vmatpush1.bf16.msra.mxu0 %v1103
    %1498 = vmatprep.subr.bf16.mxu0 %v1112
    %1499 = vmatpush1.bf16.msra.mxu0 %v1111
    %1500 = vmatprep.subr.bf16.mxu0 %v1120
    %1501 = vmatpush1.bf16.msra.mxu0 %v1119
    %1502 = vmatprep.subr.bf16.mxu0 %v1128
    %1503 = vmatpush1.bf16.msra.mxu0 %v1127
    %1504 = vmatprep.subr.bf16.mxu0 %v1136
    %1505 = vmatpush1.bf16.msra.mxu0 %v1135
    %1506 = vmatprep.subr.bf16.mxu0 %v1144
    %1507 = vmatpush1.bf16.msra.mxu0 %v1143
    %1508 = vmatprep.subr.bf16.mxu0 %v1152
    %1509 = vmatpush1.bf16.msra.mxu0 %v1151
    %1510 = vmatprep.subr.bf16.mxu0 %v1160
    %1511 = vmatpush1.bf16.msra.mxu0 %v1159
    %1512 = vmatprep.subr.bf16.mxu0 %v1168
    %1513 = vmatpush1.bf16.msra.mxu0 %v1167
    %1514 = vmatprep.subr.bf16.mxu0 %v1176
    %1515 = vmatpush1.bf16.msra.mxu0 %v1175
    %1516 = vmatprep.subr.bf16.mxu0 %v1184
    %1517 = vmatpush1.bf16.msra.mxu0 %v1183
    %1518 = vmatprep.mubr.bf16.mxu0 %v928
    %1519 = vmatmul.mubr.bf16.gmra.mrb[0].mxu0 %v927
    %v1520 = vpop.f32.mrb[0].mxu0
    %v1521 = vadd.f32 %v1478, %v1520
    %v1522 = vpop.f32.mrb[0].mxu0
    %v1523 = vadd.f32 %v1480, %v1522
    %v1524 = vpop.f32.mrb[0].mxu0
    %v1525 = vadd.f32 %v1482, %v1524
    %v1526 = vpop.f32.mrb[0].mxu0
    %v1527 = vadd.f32 %v1484, %v1526
    %1528 = vdwg.mxu0
    %s1529 = scalar_lea.vmem [#allocation12], 6
    %v1530 = vld [vmem:[%s1529] ss:$8 sm:$0xf]
    %v1531 = vld [vmem:[%s1529] ss:$8 sm:$0xf0]
    %v1532 = vor.u32 %v1530, %v1531
    %s1533 = scalar_lea.vmem [#allocation12], 7
    %v1534 = vld [vmem:[%s1533] ss:$8 sm:$0xf]
    %v1535 = vld [vmem:[%s1533] ss:$8 sm:$0xf0]
    %v1536 = vor.u32 %v1534, %v1535
    %v1537 = vadd.f32 %v1263, %v1267
    %v1538 = vrot.slane %v1537, 4
    %v1539 = vadd.f32 %v1537, %v1538
    %v1540 = vrot.slane %v1539, 2
    %v1541 = vadd.f32 %v1539, %v1540
    %v1542 = vrot.slane %v1541, 1
    %v1543 = vadd.f32 %v1541, %v1542
    %v1544 = vadd.f32 %v1265, %v1269
    %v1545 = vrot.slane %v1544, 4
    %v1546 = vadd.f32 %v1544, %v1545
    %v1547 = vrot.slane %v1546, 2
    %v1548 = vadd.f32 %v1546, %v1547
    %v1549 = vrot.slane %v1548, 1
    %v1550 = vadd.f32 %v1548, %v1549
    %v1551 = vadd.f32 %v1349, %v1353
    %v1552 = vrot.slane %v1551, 4
    %v1553 = vadd.f32 %v1551, %v1552
    %v1554 = vrot.slane %v1553, 2
    %v1555 = vadd.f32 %v1553, %v1554
    %v1556 = vrot.slane %v1555, 1
    %v1557 = vadd.f32 %v1555, %v1556
    %v1558 = vadd.f32 %v1351, %v1355
    %v1559 = vrot.slane %v1558, 4
    %v1560 = vadd.f32 %v1558, %v1559
    %v1561 = vrot.slane %v1560, 2
    %v1562 = vadd.f32 %v1560, %v1561
    %v1563 = vrot.slane %v1562, 1
    %v1564 = vadd.f32 %v1562, %v1563
    %v1565 = vadd.f32 %v1435, %v1439
    %v1566 = vrot.slane %v1565, 4
    %v1567 = vadd.f32 %v1565, %v1566
    %v1568 = vrot.slane %v1567, 2
    %v1569 = vadd.f32 %v1567, %v1568
    %v1570 = vrot.slane %v1569, 1
    %v1571 = vadd.f32 %v1569, %v1570
    %v1572 = vadd.f32 %v1437, %v1441
    %v1573 = vrot.slane %v1572, 4
    %v1574 = vadd.f32 %v1572, %v1573
    %v1575 = vrot.slane %v1574, 2
    %v1576 = vadd.f32 %v1574, %v1575
    %v1577 = vrot.slane %v1576, 1
    %v1578 = vadd.f32 %v1576, %v1577
    %v1579 = vadd.f32 %v1521, %v1525
    %v1580 = vrot.slane %v1579, 4
    %v1581 = vadd.f32 %v1579, %v1580
    %v1582 = vrot.slane %v1581, 2
    %v1583 = vadd.f32 %v1581, %v1582
    %v1584 = vrot.slane %v1583, 1
    %v1585 = vadd.f32 %v1583, %v1584
    %v1586 = vadd.f32 %v1523, %v1527
    %v1587 = vrot.slane %v1586, 4
    %v1588 = vadd.f32 %v1586, %v1587
    %v1589 = vrot.slane %v1588, 2
    %v1590 = vadd.f32 %v1588, %v1589
    %v1591 = vrot.slane %v1590, 1
    %v1592 = vadd.f32 %v1590, %v1591
    %v1593 = vmul.f32 %v1543, %v318
    %v1594 = vmul.f32 %v1550, %v318
    %v1595 = vmul.f32 %v1557, %v318
    %v1596 = vmul.f32 %v1564, %v318
    %v1597 = vmul.f32 %v1571, %v318
    %v1598 = vmul.f32 %v1578, %v318
    %v1599 = vmul.f32 %v1585, %v318
    %v1600 = vmul.f32 %v1592, %v318
    %v1601 = vmul.f32 %v1263, %v1263
    %v1602 = vmul.f32 %v1265, %v1265
    %v1603 = vmul.f32 %v1349, %v1349
    %v1604 = vmul.f32 %v1351, %v1351
    %v1605 = vmul.f32 %v1435, %v1435
    %v1606 = vmul.f32 %v1437, %v1437
    %v1607 = vmul.f32 %v1521, %v1521
    %v1608 = vmul.f32 %v1523, %v1523
    %v1609 = vmul.f32 %v1267, %v1267
    %v1610 = vmul.f32 %v1269, %v1269
    %v1611 = vmul.f32 %v1353, %v1353
    %v1612 = vmul.f32 %v1355, %v1355
    %v1613 = vmul.f32 %v1439, %v1439
    %v1614 = vmul.f32 %v1441, %v1441
    %v1615 = vmul.f32 %v1525, %v1525
    %v1616 = vmul.f32 %v1527, %v1527
    %v1617 = vadd.f32 %v1601, %v1609
    %v1618 = vrot.slane %v1617, 4
    %v1619 = vadd.f32 %v1617, %v1618
    %v1620 = vrot.slane %v1619, 2
    %v1621 = vadd.f32 %v1619, %v1620
    %v1622 = vrot.slane %v1621, 1
    %v1623 = vadd.f32 %v1621, %v1622
    %v1624 = vadd.f32 %v1602, %v1610
    %v1625 = vrot.slane %v1624, 4
    %v1626 = vadd.f32 %v1624, %v1625
    %v1627 = vrot.slane %v1626, 2
    %v1628 = vadd.f32 %v1626, %v1627
    %v1629 = vrot.slane %v1628, 1
    %v1630 = vadd.f32 %v1628, %v1629
    %v1631 = vadd.f32 %v1603, %v1611
    %v1632 = vrot.slane %v1631, 4
    %v1633 = vadd.f32 %v1631, %v1632
    %v1634 = vrot.slane %v1633, 2
    %v1635 = vadd.f32 %v1633, %v1634
    %v1636 = vrot.slane %v1635, 1
    %v1637 = vadd.f32 %v1635, %v1636
    %v1638 = vadd.f32 %v1604, %v1612
    %v1639 = vrot.slane %v1638, 4
    %v1640 = vadd.f32 %v1638, %v1639
    %v1641 = vrot.slane %v1640, 2
    %v1642 = vadd.f32 %v1640, %v1641
    %v1643 = vrot.slane %v1642, 1
    %v1644 = vadd.f32 %v1642, %v1643
    %v1645 = vadd.f32 %v1605, %v1613
    %v1646 = vrot.slane %v1645, 4
    %v1647 = vadd.f32 %v1645, %v1646
    %v1648 = vrot.slane %v1647, 2
    %v1649 = vadd.f32 %v1647, %v1648
    %v1650 = vrot.slane %v1649, 1
    %v1651 = vadd.f32 %v1649, %v1650
    %v1652 = vadd.f32 %v1606, %v1614
    %v1653 = vrot.slane %v1652, 4
    %v1654 = vadd.f32 %v1652, %v1653
    %v1655 = vrot.slane %v1654, 2
    %v1656 = vadd.f32 %v1654, %v1655
    %v1657 = vrot.slane %v1656, 1
    %v1658 = vadd.f32 %v1656, %v1657
    %v1659 = vadd.f32 %v1607, %v1615
    %v1660 = vrot.slane %v1659, 4
    %v1661 = vadd.f32 %v1659, %v1660
    %v1662 = vrot.slane %v1661, 2
    %v1663 = vadd.f32 %v1661, %v1662
    %v1664 = vrot.slane %v1663, 1
    %v1665 = vadd.f32 %v1663, %v1664
    %v1666 = vadd.f32 %v1608, %v1616
    %v1667 = vrot.slane %v1666, 4
    %v1668 = vadd.f32 %v1666, %v1667
    %v1669 = vrot.slane %v1668, 2
    %v1670 = vadd.f32 %v1668, %v1669
    %v1671 = vrot.slane %v1670, 1
    %v1672 = vadd.f32 %v1670, %v1671
    %v1673 = vmul.f32 %v1623, %v318
    %v1674 = vmul.f32 %v1630, %v318
    %v1675 = vmul.f32 %v1637, %v318
    %v1676 = vmul.f32 %v1644, %v318
    %v1677 = vmul.f32 %v1651, %v318
    %v1678 = vmul.f32 %v1658, %v318
    %v1679 = vmul.f32 %v1665, %v318
    %v1680 = vmul.f32 %v1672, %v318
    %v1681 = vmul.f32 %v1593, %v1593
    %v1682 = vmul.f32 %v1594, %v1594
    %v1683 = vmul.f32 %v1595, %v1595
    %v1684 = vmul.f32 %v1596, %v1596
    %v1685 = vmul.f32 %v1597, %v1597
    %v1686 = vmul.f32 %v1598, %v1598
    %v1687 = vmul.f32 %v1599, %v1599
    %v1688 = vmul.f32 %v1600, %v1600
    %v1689 = vsub.f32 %v1673, %v1681
    %v1690 = vsub.f32 %v1674, %v1682
    %v1691 = vsub.f32 %v1675, %v1683
    %v1692 = vsub.f32 %v1676, %v1684
    %v1693 = vsub.f32 %v1677, %v1685
    %v1694 = vsub.f32 %v1678, %v1686
    %v1695 = vsub.f32 %v1679, %v1687
    %v1696 = vsub.f32 %v1680, %v1688
    %v1697 = vadd.f32 %v1689, 1e-05
    %v1698 = vadd.f32 %v1690, 1e-05
    %v1699 = vadd.f32 %v1691, 1e-05
    %v1700 = vadd.f32 %v1692, 1e-05
    %v1701 = vadd.f32 %v1693, 1e-05
    %v1702 = vadd.f32 %v1694, 1e-05
    %v1703 = vadd.f32 %v1695, 1e-05
    %v1704 = vadd.f32 %v1696, 1e-05
    %v1705 = vrsqrt.pop %v1697
    %v1706 = vrsqrt.pop %v1698
    %v1707 = vrsqrt.pop %v1699
    %v1708 = vrsqrt.pop %v1700
    %v1709 = vrsqrt.pop %v1701
    %v1710 = vrsqrt.pop %v1702
    %v1711 = vrsqrt.pop %v1703
    %v1712 = vrsqrt.pop %v1704
    %v1721 = vcombine.low %v1705, %v1706
    %v1722 = vcombine.low %v1707, %v1708
    %v1723 = vcombine.low %v1709, %v1710
    %v1724 = vcombine.low %v1711, %v1712
    %v1726 = vunpack.c.l.s4 1966171168
    %v1727 = vunpack.c.0.s8 %v1726
    %v1728 = vlaneseq
    %v1729 = vshrl.u32 %v1728, 7
    %v1730 = vsub.s32 %v1727, %v1729
    %v1731 = vrot.slane %v1721, %v1730
    %v1733 = vunpack.c.l.s4 1966171168
    %v1734 = vunpack.c.0.s8 %v1733
    %v1735 = vlaneseq
    %v1736 = vshrl.u32 %v1735, 7
    %v1737 = vsub.s32 %v1734, %v1736
    %v1738 = vrot.slane %v1722, %v1737
    %v1740 = vunpack.c.l.s4 1966171168
    %v1741 = vunpack.c.0.s8 %v1740
    %v1742 = vlaneseq
    %v1743 = vshrl.u32 %v1742, 7
    %v1744 = vsub.s32 %v1741, %v1743
    %v1745 = vrot.slane %v1723, %v1744
    %v1747 = vunpack.c.l.s4 1966171168
    %v1748 = vunpack.c.0.s8 %v1747
    %v1749 = vlaneseq
    %v1750 = vshrl.u32 %v1749, 7
    %v1751 = vsub.s32 %v1748, %v1750
    %v1752 = vrot.slane %v1724, %v1751
    %v1753 = vcombine.low %v1731, %v1738
    %v1754 = vcombine.low %v1745, %v1752
    %v1756 = vunpack.c.l.s4 1966171168
    %v1757 = vunpack.c.0.s8 %v1756
    %v1758 = vlaneseq
    %v1759 = vshrl.u32 %v1758, 7
    %v1760 = vsub.s32 %v1757, %v1759
    %v1761 = vrot.slane %v1753, %v1760
    %v1763 = vunpack.c.l.s4 1966171168
    %v1764 = vunpack.c.0.s8 %v1763
    %v1765 = vlaneseq
    %v1766 = vshrl.u32 %v1765, 7
    %v1767 = vsub.s32 %v1764, %v1766
    %v1768 = vrot.slane %v1754, %v1767
    %v1769 = vcombine.low %v1761, %v1768
    %v1771 = vmul.f32 %v1532, %v1769
    %v1773 = vlaneseq
    %v1774 = vshrl.u32 %v1773, 7
    %v1775 = vsub.s32 0, %v1774
    %v1776 = vrot.slane %v1771, %v1775
    %v1777 = vlaneseq
    %v1778 = vshrl.u32 %v1777, 7
    %v1779 = vsub.s32 1, %v1778
    %v1780 = vrot.slane %v1771, %v1779
    %v1781 = vlaneseq
    %v1782 = vshrl.u32 %v1781, 7
    %v1783 = vsub.s32 2, %v1782
    %v1784 = vrot.slane %v1771, %v1783
    %v1785 = vlaneseq
    %v1786 = vshrl.u32 %v1785, 7
    %v1787 = vsub.s32 3, %v1786
    %v1788 = vrot.slane %v1771, %v1787
    %v1789 = vlaneseq
    %v1790 = vshrl.u32 %v1789, 7
    %v1791 = vsub.s32 4, %v1790
    %v1792 = vrot.slane %v1771, %v1791
    %v1793 = vlaneseq
    %v1794 = vshrl.u32 %v1793, 7
    %v1795 = vsub.s32 5, %v1794
    %v1796 = vrot.slane %v1771, %v1795
    %v1797 = vlaneseq
    %v1798 = vshrl.u32 %v1797, 7
    %v1799 = vsub.s32 6, %v1798
    %v1800 = vrot.slane %v1771, %v1799
    %v1801 = vlaneseq
    %v1802 = vshrl.u32 %v1801, 7
    %v1803 = vsub.s32 7, %v1802
    %v1804 = vrot.slane %v1771, %v1803
    %v1813 = vmul.f32 %v1593, %v1776
    %v1814 = vmul.f32 %v1594, %v1780
    %v1815 = vmul.f32 %v1595, %v1784
    %v1816 = vmul.f32 %v1596, %v1788
    %v1817 = vmul.f32 %v1597, %v1792
    %v1818 = vmul.f32 %v1598, %v1796
    %v1819 = vmul.f32 %v1599, %v1800
    %v1820 = vmul.f32 %v1600, %v1804
    %v1829 = vcombine.low %v1813, %v1814
    %v1830 = vcombine.low %v1815, %v1816
    %v1831 = vcombine.low %v1817, %v1818
    %v1832 = vcombine.low %v1819, %v1820
    %v1834 = vunpack.c.l.s4 1966171168
    %v1835 = vunpack.c.0.s8 %v1834
    %v1836 = vlaneseq
    %v1837 = vshrl.u32 %v1836, 7
    %v1838 = vsub.s32 %v1835, %v1837
    %v1839 = vrot.slane %v1829, %v1838
    %v1841 = vunpack.c.l.s4 1966171168
    %v1842 = vunpack.c.0.s8 %v1841
    %v1843 = vlaneseq
    %v1844 = vshrl.u32 %v1843, 7
    %v1845 = vsub.s32 %v1842, %v1844
    %v1846 = vrot.slane %v1830, %v1845
    %v1848 = vunpack.c.l.s4 1966171168
    %v1849 = vunpack.c.0.s8 %v1848
    %v1850 = vlaneseq
    %v1851 = vshrl.u32 %v1850, 7
    %v1852 = vsub.s32 %v1849, %v1851
    %v1853 = vrot.slane %v1831, %v1852
    %v1855 = vunpack.c.l.s4 1966171168
    %v1856 = vunpack.c.0.s8 %v1855
    %v1857 = vlaneseq
    %v1858 = vshrl.u32 %v1857, 7
    %v1859 = vsub.s32 %v1856, %v1858
    %v1860 = vrot.slane %v1832, %v1859
    %v1861 = vcombine.low %v1839, %v1846
    %v1862 = vcombine.low %v1853, %v1860
    %v1864 = vunpack.c.l.s4 1966171168
    %v1865 = vunpack.c.0.s8 %v1864
    %v1866 = vlaneseq
    %v1867 = vshrl.u32 %v1866, 7
    %v1868 = vsub.s32 %v1865, %v1867
    %v1869 = vrot.slane %v1861, %v1868
    %v1871 = vunpack.c.l.s4 1966171168
    %v1872 = vunpack.c.0.s8 %v1871
    %v1873 = vlaneseq
    %v1874 = vshrl.u32 %v1873, 7
    %v1875 = vsub.s32 %v1872, %v1874
    %v1876 = vrot.slane %v1862, %v1875
    %v1877 = vcombine.low %v1869, %v1876
    %v1879 = vsub.f32 %v1536, %v1877
    %v1880 = vmul.f32 %v1263, %v1776
    %v1881 = vmul.f32 %v1265, %v1780
    %v1882 = vmul.f32 %v1349, %v1784
    %v1883 = vmul.f32 %v1351, %v1788
    %v1884 = vmul.f32 %v1435, %v1792
    %v1885 = vmul.f32 %v1437, %v1796
    %v1886 = vmul.f32 %v1521, %v1800
    %v1887 = vmul.f32 %v1523, %v1804
    %v1888 = vmul.f32 %v1267, %v1776
    %v1889 = vmul.f32 %v1269, %v1780
    %v1890 = vmul.f32 %v1353, %v1784
    %v1891 = vmul.f32 %v1355, %v1788
    %v1892 = vmul.f32 %v1439, %v1792
    %v1893 = vmul.f32 %v1441, %v1796
    %v1894 = vmul.f32 %v1525, %v1800
    %v1895 = vmul.f32 %v1527, %v1804
    %v1897 = vlaneseq
    %v1898 = vshrl.u32 %v1897, 7
    %v1899 = vsub.s32 0, %v1898
    %v1900 = vrot.slane %v1879, %v1899
    %v1901 = vlaneseq
    %v1902 = vshrl.u32 %v1901, 7
    %v1903 = vsub.s32 1, %v1902
    %v1904 = vrot.slane %v1879, %v1903
    %v1905 = vlaneseq
    %v1906 = vshrl.u32 %v1905, 7
    %v1907 = vsub.s32 2, %v1906
    %v1908 = vrot.slane %v1879, %v1907
    %v1909 = vlaneseq
    %v1910 = vshrl.u32 %v1909, 7
    %v1911 = vsub.s32 3, %v1910
    %v1912 = vrot.slane %v1879, %v1911
    %v1913 = vlaneseq
    %v1914 = vshrl.u32 %v1913, 7
    %v1915 = vsub.s32 4, %v1914
    %v1916 = vrot.slane %v1879, %v1915
    %v1917 = vlaneseq
    %v1918 = vshrl.u32 %v1917, 7
    %v1919 = vsub.s32 5, %v1918
    %v1920 = vrot.slane %v1879, %v1919
    %v1921 = vlaneseq
    %v1922 = vshrl.u32 %v1921, 7
    %v1923 = vsub.s32 6, %v1922
    %v1924 = vrot.slane %v1879, %v1923
    %v1925 = vlaneseq
    %v1926 = vshrl.u32 %v1925, 7
    %v1927 = vsub.s32 7, %v1926
    %v1928 = vrot.slane %v1879, %v1927
    %v1937 = vadd.f32 %v1880, %v1900
    %v1938 = vadd.f32 %v1881, %v1904
    %v1939 = vadd.f32 %v1882, %v1908
    %v1940 = vadd.f32 %v1883, %v1912
    %v1941 = vadd.f32 %v1884, %v1916
    %v1942 = vadd.f32 %v1885, %v1920
    %v1943 = vadd.f32 %v1886, %v1924
    %v1944 = vadd.f32 %v1887, %v1928
    %v1945 = vadd.f32 %v1888, %v1900
    %v1946 = vadd.f32 %v1889, %v1904
    %v1947 = vadd.f32 %v1890, %v1908
    %v1948 = vadd.f32 %v1891, %v1912
    %v1949 = vadd.f32 %v1892, %v1916
    %v1950 = vadd.f32 %v1893, %v1920
    %v1951 = vadd.f32 %v1894, %v1924
    %v1952 = vadd.f32 %v1895, %v1928
    %v1953 = vmul.f32 %v1937, 0.2
    %v1954 = vmul.f32 %v1938, 0.2
    %v1955 = vmul.f32 %v1939, 0.2
    %v1956 = vmul.f32 %v1940, 0.2
    %v1957 = vmul.f32 %v1941, 0.2
    %v1958 = vmul.f32 %v1942, 0.2
    %v1959 = vmul.f32 %v1943, 0.2
    %v1960 = vmul.f32 %v1944, 0.2
    %v1961 = vmul.f32 %v1945, 0.2
    %v1962 = vmul.f32 %v1946, 0.2
    %v1963 = vmul.f32 %v1947, 0.2
    %v1964 = vmul.f32 %v1948, 0.2
    %v1965 = vmul.f32 %v1949, 0.2
    %v1966 = vmul.f32 %v1950, 0.2
    %v1967 = vmul.f32 %v1951, 0.2
    %v1968 = vmul.f32 %v1952, 0.2
    %v1969 = vmax.f32 %v1937, %v1953
    %v1970 = vmax.f32 %v1938, %v1954
    %v1971 = vmax.f32 %v1939, %v1955
    %v1972 = vmax.f32 %v1940, %v1956
    %v1973 = vmax.f32 %v1941, %v1957
    %v1974 = vmax.f32 %v1942, %v1958
    %v1975 = vmax.f32 %v1943, %v1959
    %v1976 = vmax.f32 %v1944, %v1960
    %v1977 = vmax.f32 %v1945, %v1961
    %v1978 = vmax.f32 %v1946, %v1962
    %v1979 = vmax.f32 %v1947, %v1963
    %v1980 = vmax.f32 %v1948, %v1964
    %v1981 = vmax.f32 %v1949, %v1965
    %v1982 = vmax.f32 %v1950, %v1966
    %v1983 = vmax.f32 %v1951, %v1967
    %v1984 = vmax.f32 %v1952, %v1968
    %s1985 = smul.u32 4, 128
    %s1986 = smul.u32 %s1985, 2
    %s1987 = sshll.u32 %s1986, 4
    %1988 = dma.done %s166, %s1987
    %v1989 = vpack.c.bf16 %v1977, %v1969
    %v1990 = vpack.c.bf16 %v1978, %v1970
    %v1991 = vpack.c.bf16 %v1979, %v1971
    %v1992 = vpack.c.bf16 %v1980, %v1972
    %v1993 = vpack.c.bf16 %v1981, %v1973
    %v1994 = vpack.c.bf16 %v1982, %v1974
    %v1995 = vpack.c.bf16 %v1983, %v1975
    %v1996 = vpack.c.bf16 %v1984, %v1976
    %v1997 = vld [vmem:[#allocation5] sm:$0xff]
    %v1998 = vld [vmem:[#allocation5 + $0x8] sm:$0xff]
    %v1999 = vld [vmem:[#allocation5 + $0x10] sm:$0xff]
    %v2000 = vld [vmem:[#allocation5 + $0x18] sm:$0xff]
    %v2001 = vld [vmem:[#allocation5 + $0x20] sm:$0xff]
    %v2002 = vld [vmem:[#allocation5 + $0x28] sm:$0xff]
    %v2003 = vld [vmem:[#allocation5 + $0x30] sm:$0xff]
    %v2004 = vld [vmem:[#allocation5 + $0x38] sm:$0xff]
    %v2005 = vld [vmem:[#allocation5 + $0x40] sm:$0xff]
    %v2006 = vld [vmem:[#allocation5 + $0x48] sm:$0xff]
    %v2007 = vld [vmem:[#allocation5 + $0x50] sm:$0xff]
    %v2008 = vld [vmem:[#allocation5 + $0x58] sm:$0xff]
    %v2009 = vld [vmem:[#allocation5 + $0x60] sm:$0xff]
    %v2010 = vld [vmem:[#allocation5 + $0x68] sm:$0xff]
    %v2011 = vld [vmem:[#allocation5 + $0x70] sm:$0xff]
    %v2012 = vld [vmem:[#allocation5 + $0x78] sm:$0xff]
    %v2013 = vld [vmem:[#allocation5 + $0x80] sm:$0xff]
    %v2014 = vld [vmem:[#allocation5 + $0x88] sm:$0xff]
    %v2015 = vld [vmem:[#allocation5 + $0x90] sm:$0xff]
    %v2016 = vld [vmem:[#allocation5 + $0x98] sm:$0xff]
    %v2017 = vld [vmem:[#allocation5 + $0xa0] sm:$0xff]
    %v2018 = vld [vmem:[#allocation5 + $0xa8] sm:$0xff]
    %v2019 = vld [vmem:[#allocation5 + $0xb0] sm:$0xff]
    %v2020 = vld [vmem:[#allocation5 + $0xb8] sm:$0xff]
    %v2021 = vld [vmem:[#allocation5 + $0xc0] sm:$0xff]
    %v2022 = vld [vmem:[#allocation5 + $0xc8] sm:$0xff]
    %v2023 = vld [vmem:[#allocation5 + $0xd0] sm:$0xff]
    %v2024 = vld [vmem:[#allocation5 + $0xd8] sm:$0xff]
    %v2025 = vld [vmem:[#allocation5 + $0xe0] sm:$0xff]
    %v2026 = vld [vmem:[#allocation5 + $0xe8] sm:$0xff]
    %v2027 = vld [vmem:[#allocation5 + $0xf0] sm:$0xff]
    %v2028 = vld [vmem:[#allocation5 + $0xf8] sm:$0xff]
    %v2029 = vld [vmem:[#allocation5 + $0x100] sm:$0xff]
    %v2030 = vld [vmem:[#allocation5 + $0x108] sm:$0xff]
    %v2031 = vld [vmem:[#allocation5 + $0x110] sm:$0xff]
    %v2032 = vld [vmem:[#allocation5 + $0x118] sm:$0xff]
    %v2033 = vld [vmem:[#allocation5 + $0x120] sm:$0xff]
    %v2034 = vld [vmem:[#allocation5 + $0x128] sm:$0xff]
    %v2035 = vld [vmem:[#allocation5 + $0x130] sm:$0xff]
    %v2036 = vld [vmem:[#allocation5 + $0x138] sm:$0xff]
    %v2037 = vld [vmem:[#allocation5 + $0x140] sm:$0xff]
    %v2038 = vld [vmem:[#allocation5 + $0x148] sm:$0xff]
    %v2039 = vld [vmem:[#allocation5 + $0x150] sm:$0xff]
    %v2040 = vld [vmem:[#allocation5 + $0x158] sm:$0xff]
    %v2041 = vld [vmem:[#allocation5 + $0x160] sm:$0xff]
    %v2042 = vld [vmem:[#allocation5 + $0x168] sm:$0xff]
    %v2043 = vld [vmem:[#allocation5 + $0x170] sm:$0xff]
    %v2044 = vld [vmem:[#allocation5 + $0x178] sm:$0xff]
    %v2045 = vld [vmem:[#allocation5 + $0x180] sm:$0xff]
    %v2046 = vld [vmem:[#allocation5 + $0x188] sm:$0xff]
    %v2047 = vld [vmem:[#allocation5 + $0x190] sm:$0xff]
    %v2048 = vld [vmem:[#allocation5 + $0x198] sm:$0xff]
    %v2049 = vld [vmem:[#allocation5 + $0x1a0] sm:$0xff]
    %v2050 = vld [vmem:[#allocation5 + $0x1a8] sm:$0xff]
    %v2051 = vld [vmem:[#allocation5 + $0x1b0] sm:$0xff]
    %v2052 = vld [vmem:[#allocation5 + $0x1b8] sm:$0xff]
    %v2053 = vld [vmem:[#allocation5 + $0x1c0] sm:$0xff]
    %v2054 = vld [vmem:[#allocation5 + $0x1c8] sm:$0xff]
    %v2055 = vld [vmem:[#allocation5 + $0x1d0] sm:$0xff]
    %v2056 = vld [vmem:[#allocation5 + $0x1d8] sm:$0xff]
    %v2057 = vld [vmem:[#allocation5 + $0x1e0] sm:$0xff]
    %v2058 = vld [vmem:[#allocation5 + $0x1e8] sm:$0xff]
    %v2059 = vld [vmem:[#allocation5 + $0x1f0] sm:$0xff]
    %v2060 = vld [vmem:[#allocation5 + $0x1f8] sm:$0xff]
    %v2061 = vld [vmem:[#allocation5 + $0x200] sm:$0xff]
    %v2062 = vld [vmem:[#allocation5 + $0x208] sm:$0xff]
    %v2063 = vld [vmem:[#allocation5 + $0x210] sm:$0xff]
    %v2064 = vld [vmem:[#allocation5 + $0x218] sm:$0xff]
    %v2065 = vld [vmem:[#allocation5 + $0x220] sm:$0xff]
    %v2066 = vld [vmem:[#allocation5 + $0x228] sm:$0xff]
    %v2067 = vld [vmem:[#allocation5 + $0x230] sm:$0xff]
    %v2068 = vld [vmem:[#allocation5 + $0x238] sm:$0xff]
    %v2069 = vld [vmem:[#allocation5 + $0x240] sm:$0xff]
    %v2070 = vld [vmem:[#allocation5 + $0x248] sm:$0xff]
    %v2071 = vld [vmem:[#allocation5 + $0x250] sm:$0xff]
    %v2072 = vld [vmem:[#allocation5 + $0x258] sm:$0xff]
    %v2073 = vld [vmem:[#allocation5 + $0x260] sm:$0xff]
    %v2074 = vld [vmem:[#allocation5 + $0x268] sm:$0xff]
    %v2075 = vld [vmem:[#allocation5 + $0x270] sm:$0xff]
    %v2076 = vld [vmem:[#allocation5 + $0x278] sm:$0xff]
    %v2077 = vld [vmem:[#allocation5 + $0x280] sm:$0xff]
    %v2078 = vld [vmem:[#allocation5 + $0x288] sm:$0xff]
    %v2079 = vld [vmem:[#allocation5 + $0x290] sm:$0xff]
    %v2080 = vld [vmem:[#allocation5 + $0x298] sm:$0xff]
    %v2081 = vld [vmem:[#allocation5 + $0x2a0] sm:$0xff]
    %v2082 = vld [vmem:[#allocation5 + $0x2a8] sm:$0xff]
    %v2083 = vld [vmem:[#allocation5 + $0x2b0] sm:$0xff]
    %v2084 = vld [vmem:[#allocation5 + $0x2b8] sm:$0xff]
    %v2085 = vld [vmem:[#allocation5 + $0x2c0] sm:$0xff]
    %v2086 = vld [vmem:[#allocation5 + $0x2c8] sm:$0xff]
    %v2087 = vld [vmem:[#allocation5 + $0x2d0] sm:$0xff]
    %v2088 = vld [vmem:[#allocation5 + $0x2d8] sm:$0xff]
    %v2089 = vld [vmem:[#allocation5 + $0x2e0] sm:$0xff]
    %v2090 = vld [vmem:[#allocation5 + $0x2e8] sm:$0xff]
    %v2091 = vld [vmem:[#allocation5 + $0x2f0] sm:$0xff]
    %v2092 = vld [vmem:[#allocation5 + $0x2f8] sm:$0xff]
    %v2093 = vld [vmem:[#allocation5 + $0x300] sm:$0xff]
    %v2094 = vld [vmem:[#allocation5 + $0x308] sm:$0xff]
    %v2095 = vld [vmem:[#allocation5 + $0x310] sm:$0xff]
    %v2096 = vld [vmem:[#allocation5 + $0x318] sm:$0xff]
    %v2097 = vld [vmem:[#allocation5 + $0x320] sm:$0xff]
    %v2098 = vld [vmem:[#allocation5 + $0x328] sm:$0xff]
    %v2099 = vld [vmem:[#allocation5 + $0x330] sm:$0xff]
    %v2100 = vld [vmem:[#allocation5 + $0x338] sm:$0xff]
    %v2101 = vld [vmem:[#allocation5 + $0x340] sm:$0xff]
    %v2102 = vld [vmem:[#allocation5 + $0x348] sm:$0xff]
    %v2103 = vld [vmem:[#allocation5 + $0x350] sm:$0xff]
    %v2104 = vld [vmem:[#allocation5 + $0x358] sm:$0xff]
    %v2105 = vld [vmem:[#allocation5 + $0x360] sm:$0xff]
    %v2106 = vld [vmem:[#allocation5 + $0x368] sm:$0xff]
    %v2107 = vld [vmem:[#allocation5 + $0x370] sm:$0xff]
    %v2108 = vld [vmem:[#allocation5 + $0x378] sm:$0xff]
    %v2109 = vld [vmem:[#allocation5 + $0x380] sm:$0xff]
    %v2110 = vld [vmem:[#allocation5 + $0x388] sm:$0xff]
    %v2111 = vld [vmem:[#allocation5 + $0x390] sm:$0xff]
    %v2112 = vld [vmem:[#allocation5 + $0x398] sm:$0xff]
    %v2113 = vld [vmem:[#allocation5 + $0x3a0] sm:$0xff]
    %v2114 = vld [vmem:[#allocation5 + $0x3a8] sm:$0xff]
    %v2115 = vld [vmem:[#allocation5 + $0x3b0] sm:$0xff]
    %v2116 = vld [vmem:[#allocation5 + $0x3b8] sm:$0xff]
    %v2117 = vld [vmem:[#allocation5 + $0x3c0] sm:$0xff]
    %v2118 = vld [vmem:[#allocation5 + $0x3c8] sm:$0xff]
    %v2119 = vld [vmem:[#allocation5 + $0x3d0] sm:$0xff]
    %v2120 = vld [vmem:[#allocation5 + $0x3d8] sm:$0xff]
    %v2121 = vld [vmem:[#allocation5 + $0x3e0] sm:$0xff]
    %v2122 = vld [vmem:[#allocation5 + $0x3e8] sm:$0xff]
    %v2123 = vld [vmem:[#allocation5 + $0x3f0] sm:$0xff]
    %v2124 = vld [vmem:[#allocation5 + $0x3f8] sm:$0xff]
    %s2125 = scalar_lea.vmem [#allocation12], 64
    %v2126 = vld [vmem:[%s2125] ss:$8 sm:$0x3]
    %v2128 = vlaneseq
    %v2129 = vshrl.u32 %v2128, 7
    %v2130 = vsub.s32 0, %v2129
    %v2131 = vrot.slane %v2126, %v2130
    %v2132 = vlaneseq
    %v2133 = vshrl.u32 %v2132, 7
    %v2134 = vsub.s32 1, %v2133
    %v2135 = vrot.slane %v2126, %v2134
    %2138 = vmatprep.subr.bf16.mxu0 %v1998
    %2139 = vmatpush1.bf16.msra.mxu0 %v1997
    %2140 = vmatprep.subr.bf16.mxu0 %v2000
    %2141 = vmatpush1.bf16.msra.mxu0 %v1999
    %2142 = vmatprep.subr.bf16.mxu0 %v2002
    %2143 = vmatpush1.bf16.msra.mxu0 %v2001
    %2144 = vmatprep.subr.bf16.mxu0 %v2004
    %2145 = vmatpush1.bf16.msra.mxu0 %v2003
    %2146 = vmatprep.subr.bf16.mxu0 %v2006
    %2147 = vmatpush1.bf16.msra.mxu0 %v2005
    %2148 = vmatprep.subr.bf16.mxu0 %v2008
    %2149 = vmatpush1.bf16.msra.mxu0 %v2007
    %2150 = vmatprep.subr.bf16.mxu0 %v2010
    %2151 = vmatpush1.bf16.msra.mxu0 %v2009
    %2152 = vmatprep.subr.bf16.mxu0 %v2012
    %2153 = vmatpush1.bf16.msra.mxu0 %v2011
    %2154 = vmatprep.subr.bf16.mxu0 %v2014
    %2155 = vmatpush1.bf16.msra.mxu0 %v2013
    %2156 = vmatprep.subr.bf16.mxu0 %v2016
    %2157 = vmatpush1.bf16.msra.mxu0 %v2015
    %2158 = vmatprep.subr.bf16.mxu0 %v2018
    %2159 = vmatpush1.bf16.msra.mxu0 %v2017
    %2160 = vmatprep.subr.bf16.mxu0 %v2020
    %2161 = vmatpush1.bf16.msra.mxu0 %v2019
    %2162 = vmatprep.subr.bf16.mxu0 %v2022
    %2163 = vmatpush1.bf16.msra.mxu0 %v2021
    %2164 = vmatprep.subr.bf16.mxu0 %v2024
    %2165 = vmatpush1.bf16.msra.mxu0 %v2023
    %2166 = vmatprep.subr.bf16.mxu0 %v2026
    %2167 = vmatpush1.bf16.msra.mxu0 %v2025
    %2168 = vmatprep.subr.bf16.mxu0 %v2028
    %2169 = vmatpush1.bf16.msra.mxu0 %v2027
    %2170 = vmatprep.mubr.bf16.mxu0 %v1990
    %2171 = vmatmul.mubr.bf16.gmra.mrb[0].mxu0 %v1989
    %v2172 = vpop.f32.mrb[0].mxu0
    %v2173 = vadd.f32 %v2131, %v2172
    %v2174 = vpop.f32.mrb[0].mxu0
    %v2175 = vadd.f32 %v2135, %v2174
    %v2176 = vpop.f32.mrb[0].mxu0
    %v2177 = vadd.f32 %v2131, %v2176
    %v2178 = vpop.f32.mrb[0].mxu0
    %v2179 = vadd.f32 %v2135, %v2178
    %2180 = vdwg.mxu0
    %2181 = vmatprep.subr.bf16.mxu0 %v2030
    %2182 = vmatpush1.bf16.msra.mxu0 %v2029
    %2183 = vmatprep.subr.bf16.mxu0 %v2032
    %2184 = vmatpush1.bf16.msra.mxu0 %v2031
    %2185 = vmatprep.subr.bf16.mxu0 %v2034
    %2186 = vmatpush1.bf16.msra.mxu0 %v2033
    %2187 = vmatprep.subr.bf16.mxu0 %v2036
    %2188 = vmatpush1.bf16.msra.mxu0 %v2035
    %2189 = vmatprep.subr.bf16.mxu0 %v2038
    %2190 = vmatpush1.bf16.msra.mxu0 %v2037
    %2191 = vmatprep.subr.bf16.mxu0 %v2040
    %2192 = vmatpush1.bf16.msra.mxu0 %v2039
    %2193 = vmatprep.subr.bf16.mxu0 %v2042
    %2194 = vmatpush1.bf16.msra.mxu0 %v2041
    %2195 = vmatprep.subr.bf16.mxu0 %v2044
    %2196 = vmatpush1.bf16.msra.mxu0 %v2043
    %2197 = vmatprep.subr.bf16.mxu0 %v2046
    %2198 = vmatpush1.bf16.msra.mxu0 %v2045
    %2199 = vmatprep.subr.bf16.mxu0 %v2048
    %2200 = vmatpush1.bf16.msra.mxu0 %v2047
    %2201 = vmatprep.subr.bf16.mxu0 %v2050
    %2202 = vmatpush1.bf16.msra.mxu0 %v2049
    %2203 = vmatprep.subr.bf16.mxu0 %v2052
    %2204 = vmatpush1.bf16.msra.mxu0 %v2051
    %2205 = vmatprep.subr.bf16.mxu0 %v2054
    %2206 = vmatpush1.bf16.msra.mxu0 %v2053
    %2207 = vmatprep.subr.bf16.mxu0 %v2056
    %2208 = vmatpush1.bf16.msra.mxu0 %v2055
    %2209 = vmatprep.subr.bf16.mxu0 %v2058
    %2210 = vmatpush1.bf16.msra.mxu0 %v2057
    %2211 = vmatprep.subr.bf16.mxu0 %v2060
    %2212 = vmatpush1.bf16.msra.mxu0 %v2059
    %2213 = vmatprep.mubr.bf16.mxu0 %v1992
    %2214 = vmatmul.mubr.bf16.gmra.mrb[0].mxu0 %v1991
    %v2215 = vpop.f32.mrb[0].mxu0
    %v2216 = vadd.f32 %v2173, %v2215
    %v2217 = vpop.f32.mrb[0].mxu0
    %v2218 = vadd.f32 %v2175, %v2217
    %v2219 = vpop.f32.mrb[0].mxu0
    %v2220 = vadd.f32 %v2177, %v2219
    %v2221 = vpop.f32.mrb[0].mxu0
    %v2222 = vadd.f32 %v2179, %v2221
    %2223 = vdwg.mxu0
    %2224 = vmatprep.subr.bf16.mxu0 %v2062
    %2225 = vmatpush1.bf16.msra.mxu0 %v2061
    %2226 = vmatprep.subr.bf16.mxu0 %v2064
    %2227 = vmatpush1.bf16.msra.mxu0 %v2063
    %2228 = vmatprep.subr.bf16.mxu0 %v2066
    %2229 = vmatpush1.bf16.msra.mxu0 %v2065
    %2230 = vmatprep.subr.bf16.mxu0 %v2068
    %2231 = vmatpush1.bf16.msra.mxu0 %v2067
    %2232 = vmatprep.subr.bf16.mxu0 %v2070
    %2233 = vmatpush1.bf16.msra.mxu0 %v2069
    %2234 = vmatprep.subr.bf16.mxu0 %v2072
    %2235 = vmatpush1.bf16.msra.mxu0 %v2071
    %2236 = vmatprep.subr.bf16.mxu0 %v2074
    %2237 = vmatpush1.bf16.msra.mxu0 %v2073
    %2238 = vmatprep.subr.bf16.mxu0 %v2076
    %2239 = vmatpush1.bf16.msra.mxu0 %v2075
    %2240 = vmatprep.subr.bf16.mxu0 %v2078
    %2241 = vmatpush1.bf16.msra.mxu0 %v2077
    %2242 = vmatprep.subr.bf16.mxu0 %v2080
    %2243 = vmatpush1.bf16.msra.mxu0 %v2079
    %2244 = vmatprep.subr.bf16.mxu0 %v2082
    %2245 = vmatpush1.bf16.msra.mxu0 %v2081
    %2246 = vmatprep.subr.bf16.mxu0 %v2084
    %2247 = vmatpush1.bf16.msra.mxu0 %v2083
    %2248 = vmatprep.subr.bf16.mxu0 %v2086
    %2249 = vmatpush1.bf16.msra.mxu0 %v2085
    %2250 = vmatprep.subr.bf16.mxu0 %v2088
    %2251 = vmatpush1.bf16.msra.mxu0 %v2087
    %2252 = vmatprep.subr.bf16.mxu0 %v2090
    %2253 = vmatpush1.bf16.msra.mxu0 %v2089
    %2254 = vmatprep.subr.bf16.mxu0 %v2092
    %2255 = vmatpush1.bf16.msra.mxu0 %v2091
    %2256 = vmatprep.mubr.bf16.mxu0 %v1994
    %2257 = vmatmul.mubr.bf16.gmra.mrb[0].mxu0 %v1993
    %v2258 = vpop.f32.mrb[0].mxu0
    %v2259 = vadd.f32 %v2216, %v2258
    %v2260 = vpop.f32.mrb[0].mxu0
    %v2261 = vadd.f32 %v2218, %v2260
    %v2262 = vpop.f32.mrb[0].mxu0
    %v2263 = vadd.f32 %v2220, %v2262
    %v2264 = vpop.f32.mrb[0].mxu0
    %v2265 = vadd.f32 %v2222, %v2264
    %2266 = vdwg.mxu0
    %2267 = vmatprep.subr.bf16.mxu0 %v2094
    %2268 = vmatpush1.bf16.msra.mxu0 %v2093
    %2269 = vmatprep.subr.bf16.mxu0 %v2096
    %2270 = vmatpush1.bf16.msra.mxu0 %v2095
    %2271 = vmatprep.subr.bf16.mxu0 %v2098
    %2272 = vmatpush1.bf16.msra.mxu0 %v2097
    %2273 = vmatprep.subr.bf16.mxu0 %v2100
    %2274 = vmatpush1.bf16.msra.mxu0 %v2099
    %2275 = vmatprep.subr.bf16.mxu0 %v2102
    %2276 = vmatpush1.bf16.msra.mxu0 %v2101
    %2277 = vmatprep.subr.bf16.mxu0 %v2104
    %2278 = vmatpush1.bf16.msra.mxu0 %v2103
    %2279 = vmatprep.subr.bf16.mxu0 %v2106
    %2280 = vmatpush1.bf16.msra.mxu0 %v2105
    %2281 = vmatprep.subr.bf16.mxu0 %v2108
    %2282 = vmatpush1.bf16.msra.mxu0 %v2107
    %2283 = vmatprep.subr.bf16.mxu0 %v2110
    %2284 = vmatpush1.bf16.msra.mxu0 %v2109
    %2285 = vmatprep.subr.bf16.mxu0 %v2112
    %2286 = vmatpush1.bf16.msra.mxu0 %v2111
    %2287 = vmatprep.subr.bf16.mxu0 %v2114
    %2288 = vmatpush1.bf16.msra.mxu0 %v2113
    %2289 = vmatprep.subr.bf16.mxu0 %v2116
    %2290 = vmatpush1.bf16.msra.mxu0 %v2115
    %2291 = vmatprep.subr.bf16.mxu0 %v2118
    %2292 = vmatpush1.bf16.msra.mxu0 %v2117
    %2293 = vmatprep.subr.bf16.mxu0 %v2120
    %2294 = vmatpush1.bf16.msra.mxu0 %v2119
    %2295 = vmatprep.subr.bf16.mxu0 %v2122
    %2296 = vmatpush1.bf16.msra.mxu0 %v2121
    %2297 = vmatprep.subr.bf16.mxu0 %v2124
    %2298 = vmatpush1.bf16.msra.mxu0 %v2123
    %2299 = vmatprep.mubr.bf16.mxu0 %v1996
    %2300 = vmatmul.mubr.bf16.gmra.mrb[0].mxu0 %v1995
    %v2301 = vpop.f32.mrb[0].mxu0
    %v2302 = vadd.f32 %v2259, %v2301
    %v2303 = vpop.f32.mrb[0].mxu0
    %v2304 = vadd.f32 %v2261, %v2303
    %v2305 = vpop.f32.mrb[0].mxu0
    %v2306 = vadd.f32 %v2263, %v2305
    %v2307 = vpop.f32.mrb[0].mxu0
    %v2308 = vadd.f32 %v2265, %v2307
    %2309 = vdwg.mxu0
    %v2310 = vtanh.pop %v2302
    %v2311 = vtanh.pop %v2304
    %v2312 = vtanh.pop %v2306
    %v2313 = vtanh.pop %v2308
    %2314 = vst [vmem:[#allocation13] sm:$0xff] %v2310
    %2315 = vst [vmem:[#allocation13 + $0x8] sm:$0xff] %v2311
    %2316 = vst [vmem:[#allocation13 + $0x10] sm:$0xff] %v2312
    %2317 = vst [vmem:[#allocation13 + $0x18] sm:$0xff] %v2313
    // Predicated region
    $region26: #{tpu_custom_call.1} parent=1 // pred_check
      _
    $region27: #{tpu_custom_call.1} parent=1 // pred_check_branch
      %2319 = sbr.rel (0) target = $region29
    $region28: #{tpu_custom_call.1} parent=1 // pred_region
      %s2321 = ssub.s32 512, 512
      %2322 = vsyncadd [#allocation9], %s2321
      %s2323 = sshll.u32 [#allocation13], 4
      %s2324 = int_to_ptr.vmem [resolvable:$true] %s2323
      %2329 = dma.vmem_to_hbm [thread:$0]  %s2324, 512, %s7, [#allocation9], 256, 256, 16
    $region29: #{tpu_custom_call.1} parent=1 // pred_fallthru
      _
    // Predicated region
    $region30: #{tpu_custom_call.1} parent=1 // pred_check
      _
    $region31: #{tpu_custom_call.1} parent=1 // pred_check_branch
      %2331 = sbr.rel (0) target = $region33
    $region32: #{tpu_custom_call.1} parent=1 // pred_region
      %2332 = dma.done [#allocation9], 512
    $region33: #{tpu_custom_call.1} parent=1 // pred_fallthru
      _
    %2333 = vsyncpa [#allocation8], 1
    %2334 = vsyncpa [#allocation11], 1
    %2335 = vsyncpa [#allocation9], 1
  %2336 = vsyncmov [#allocation6]
  %s2337 = vpop.sfrf %2336
  %p2338 = scmp.eq.s32.totalorder %s2337, 0
  %p2339 = pneg %p2338
  %2341 = shalt.err (%p2339)
  %s2342 = scalar_lea.sflag [#allocation6], 1
  %2343 = vsyncmov %s2342
  %s2344 = vpop.sfrf %2343
  %p2345 = scmp.eq.s32.totalorder %s2344, 0
  %p2346 = pneg %p2345
  %2348 = shalt.err (%p2346)
  %s2349 = scalar_lea.sflag [#allocation6], 2
  %2350 = vsyncmov %s2349
  %s2351 = vpop.sfrf %2350
  %p2352 = scmp.eq.s32.totalorder %s2351, 0
  %p2353 = pneg %p2352
  %2355 = shalt.err (%p2353)
  %s2356 = scalar_lea.sflag [#allocation6], 3
  %2357 = vsyncmov %s2356
  %s2358 = vpop.sfrf %2357
  %p2359 = scmp.eq.s32.totalorder %s2358, 0
  %p2360 = pneg %p2359
  %2362 = shalt.err (%p2360)

</llo_original>
